<compile_context>
chip_gen: v7x
topology: tpu7x:2x2x1
jax: 0.10.0
libtpu: 0.0.40
codegen_flags: <defaults>
</compile_context>

<pallas_src>
import functools

import jax
import jax.numpy as jnp
from jax.experimental import pallas as pl
from jax.experimental.pallas import tpu as pltpu

EPS = 1e-5


def bottleneck_kernel(x_ref, w1_ref, w2a_ref, w2b_ref, w2c_ref, w3_ref,
                      cm_ref, g1_ref, b1_ref, g2_ref, b2_ref, g3_ref, b3_ref,
                      out_ref, *, H):
    """All operands live in the lane-dense (R = N*H, WC = W*C) layout.

    x_ref              : (R, WC)   f32  input activations
    w1_ref, w3_ref     : (WC, WC)  bf16 block-diagonal 1x1-conv weights
    w2{a,b,c}_ref      : (WC, WC)  bf16 block-banded 3x3-conv weights (ky=0,1,2)
    cm_ref             : (WC, WC)  f32  per-channel averaging matrix (incl. 1/(N*H*W))
    g*_ref, b*_ref     : (1, WC)   f32  BN gamma/beta pre-tiled across the W groups
    out_ref            : (R, WC)   f32
    """
    f32 = jnp.float32
    bf16 = jnp.bfloat16
    R = x_ref.shape[0]
    cm = cm_ref[...]

    def bn(o, g, b):
        # Training-mode BatchNorm over (N, H, W): fused sum / sum-of-squares,
        # single stacked (2, WC) matmul for the channel collapse + re-broadcast.
        s = jnp.sum(o, axis=0, keepdims=True)                       # (1, WC)
        ss = jnp.sum(o * o, axis=0, keepdims=True)                  # (1, WC)
        stats = jnp.concatenate([s, ss], axis=0)                    # (2, WC)
        red = jnp.dot(stats, cm, preferred_element_type=f32)        # (2, WC)
        mean = red[0:1, :]                                          # per-channel mean (dense lanes)
        var = red[1:2, :] - mean * mean                             # biased batch variance
        scale = g * jax.lax.rsqrt(var + EPS)
        return (o - mean) * scale + b

    # Row index -> h position, for the H-boundary masks of the 3x3 conv.
    h_idx = jax.lax.broadcasted_iota(jnp.int32, (R, x_ref.shape[1]), 0) % H

    # ---- conv1 (1x1) + bn1 + relu -------------------------------------------
    o1 = jnp.dot(x_ref[...].astype(bf16), w1_ref[...], preferred_element_type=f32)
    o1 = jnp.maximum(bn(o1, g1_ref[...], b1_ref[...]), 0.0)

    # ---- conv2 (3x3, stride 1, pad 1) + bn2 + relu ---------------------------
    # dy = -1 / +1 neighbours via sublane rolls (XLU) + boundary zero masks;
    # three accumulated K=WC matmuls, one per ky.  (W-direction shifts and
    # W-boundary zero padding are baked into the banded weights.)
    dn = jnp.where(h_idx != 0,
                   pltpu.roll(o1, shift=1, axis=0), 0.0).astype(bf16)       # row r <- o1[r-1]
    up = jnp.where(h_idx != H - 1,
                   pltpu.roll(o1, shift=R - 1, axis=0), 0.0).astype(bf16)   # row r <- o1[r+1]
    o1b = o1.astype(bf16)
    o2 = (jnp.dot(dn, w2a_ref[...], preferred_element_type=f32)
          + jnp.dot(o1b, w2b_ref[...], preferred_element_type=f32)
          + jnp.dot(up, w2c_ref[...], preferred_element_type=f32))
    o2 = jnp.maximum(bn(o2, g2_ref[...], b2_ref[...]), 0.0)

    # ---- conv3 (1x1) + bn3 + residual add + relu -----------------------------
    o3 = jnp.dot(o2.astype(bf16), w3_ref[...], preferred_element_type=f32)
    o3 = bn(o3, g3_ref[...], b3_ref[...])
    out_ref[...] = jnp.maximum(o3 + x_ref[...], 0.0)   # f32 identity, read here only


def make_bottleneck(params, N, C, H, W):
    """Builds all layout constants ONCE and returns a jitted forward fn(x_nchw)."""
    Cout = params["w3"].shape[1]
    assert Cout == C, "identity residual requires planes*expansion == inplanes"
    R, WC = N * H, W * C

    # ---- one-time constant construction (hoisted out of the per-call path) ---
    eye_w = jnp.eye(W, dtype=jnp.float32)
    w1big = jnp.kron(eye_w, params["w1"]).astype(jnp.bfloat16)       # (WC, WC) block-diag
    w3big = jnp.kron(eye_w, params["w3"]).astype(jnp.bfloat16)       # (WC, WC) block-diag

    def banded(w2_ky):  # (3, C, Cout) -> (WC, WC); bakes in W shifts + W-boundary zero pad
        return sum(jnp.kron(jnp.eye(W, k=-(kx - 1), dtype=jnp.float32), w2_ky[kx])
                   for kx in range(3))
    w2a = banded(params["w2"][0]).astype(jnp.bfloat16)               # ky = 0  (h-1)
    w2b = banded(params["w2"][1]).astype(jnp.bfloat16)               # ky = 1  (h)
    w2c = banded(params["w2"][2]).astype(jnp.bfloat16)               # ky = 2  (h+1)

    inv_n = 1.0 / float(N * H * W)
    chan_mean = inv_n * jnp.kron(jnp.ones((W, W), jnp.float32),
                                 jnp.eye(C, dtype=jnp.float32))      # (WC, WC), f32

    def dense(v):  # (1, C) -> (1, W*C), lane layout w*C + c
        return jnp.tile(v.reshape(1, C), (1, W)).astype(jnp.float32)
    g1d, b1d = dense(params["g1"]), dense(params["b1"])
    g2d, b2d = dense(params["g2"]), dense(params["b2"])
    g3d, b3d = dense(params["g3"]), dense(params["b3"])

    vmem = pl.BlockSpec(memory_space=pltpu.MemorySpace.VMEM)
    call = pl.pallas_call(
        functools.partial(bottleneck_kernel, H=H),
        out_shape=jax.ShapeDtypeStruct((R, WC), jnp.float32),
        in_specs=[vmem] * 13,
        out_specs=vmem,
    )

    @jax.jit
    def fwd(x_nchw):
        x2d = jnp.transpose(x_nchw, (0, 2, 3, 1)).reshape(R, WC)
        out2d = call(x2d, w1big, w2a, w2b, w2c, w3big, chan_mean,
                     g1d, b1d, g2d, b2d, g3d, b3d)
        return jnp.transpose(out2d.reshape(N, H, W, Cout), (0, 3, 1, 2))

    return fwd


# ------------------------------ pure-JAX reference ----------------------------
def _conv_nhwc(x, w_hwio):
    return jax.lax.conv_general_dilated(
        x, w_hwio, window_strides=(1, 1), padding="SAME",
        dimension_numbers=("NHWC", "HWIO", "NHWC"))


def _bn_train_nhwc(x, gamma, beta):
    m = jnp.mean(x, axis=(0, 1, 2), keepdims=True)
    v = jnp.mean((x - m) ** 2, axis=(0, 1, 2), keepdims=True)
    return (x - m) * jax.lax.rsqrt(v + EPS) * gamma + beta


def bottleneck_ref(x_nhwc, params):
    Cin = x_nhwc.shape[-1]
    Cout = params["w3"].shape[1]
    w1 = params["w1"].reshape(1, 1, Cin, Cin)
    w2 = params["w2"]                        # (3, 3, Cin, Cin) == HWIO
    w3 = params["w3"].reshape(1, 1, Cin, Cout)
    o = jax.nn.relu(_bn_train_nhwc(_conv_nhwc(x_nhwc, w1),
                                   params["g1"], params["b1"]))
    o = jax.nn.relu(_bn_train_nhwc(_conv_nhwc(o, w2),
                                   params["g2"], params["b2"]))
    o = _bn_train_nhwc(_conv_nhwc(o, w3), params["g3"], params["b3"])
    return jax.nn.relu(o + x_nhwc)


# ------------------------------------ main -------------------------------------
if __name__ == "__main__":
    key = jax.random.PRNGKey(0)
    # Bottleneck(inplanes=16, planes=4): conv3 out = planes * 4 = 16 = inplanes,
    # so the residual add works without a downsample (stride=1).
    N, C, H, W = 2, 16, 16, 16
    planes = 4
    Cout = planes * 4  # == C

    ks = jax.random.split(key, 10)
    params = {
        # conv weights stored as (Cin, Cout) / (kh, kw, Cin, Cout) (HWIO)
        "w1": jax.random.normal(ks[0], (C, C), jnp.float32) * 0.1,
        "g1": 1.0 + 0.1 * jax.random.normal(ks[1], (1, C), jnp.float32),
        "b1": 0.1 * jax.random.normal(ks[2], (1, C), jnp.float32),
        "w2": jax.random.normal(ks[3], (3, 3, C, C), jnp.float32) * 0.05,
        "g2": 1.0 + 0.1 * jax.random.normal(ks[4], (1, C), jnp.float32),
        "b2": 0.1 * jax.random.normal(ks[5], (1, C), jnp.float32),
        "w3": jax.random.normal(ks[6], (C, Cout), jnp.float32) * 0.1,
        "g3": 1.0 + 0.1 * jax.random.normal(ks[7], (1, Cout), jnp.float32),
        "b3": 0.1 * jax.random.normal(ks[8], (1, Cout), jnp.float32),
    }

    x_nchw = jax.random.normal(ks[9], (N, C, H, W), jnp.float32)  # PyTorch layout

    bottleneck = make_bottleneck(params, N, C, H, W)   # constants built once here
    out_nchw = bottleneck(x_nchw)
    jax.block_until_ready(out_nchw)

    x_nhwc = jnp.transpose(x_nchw, (0, 2, 3, 1))
    ref_nchw = jnp.transpose(bottleneck_ref(x_nhwc, params), (0, 3, 1, 2))

    assert out_nchw.shape == (N, Cout, H, W)
    # Tolerance accounts for bf16 MXU operands (f32 accumulation / BN / residual).
    max_err = float(jnp.max(jnp.abs(out_nchw - ref_nchw)))
    assert jnp.allclose(out_nchw, ref_nchw, atol=1e-1, rtol=5e-2), max_err

    print("KERNEL_OK")
</pallas_src>

<mosaic_0001>
module attributes {stable_mosaic.version = 11 : i64} {
  func.func @bottleneck_kernel(%arg0: memref<32x256xf32, #tpu.memory_space<vmem>>, %arg1: memref<256x256xbf16, #tpu.memory_space<vmem>>, %arg2: memref<256x256xbf16, #tpu.memory_space<vmem>>, %arg3: memref<256x256xbf16, #tpu.memory_space<vmem>>, %arg4: memref<256x256xbf16, #tpu.memory_space<vmem>>, %arg5: memref<256x256xbf16, #tpu.memory_space<vmem>>, %arg6: memref<256x256xf32, #tpu.memory_space<vmem>>, %arg7: memref<1x256xf32, #tpu.memory_space<vmem>>, %arg8: memref<1x256xf32, #tpu.memory_space<vmem>>, %arg9: memref<1x256xf32, #tpu.memory_space<vmem>>, %arg10: memref<1x256xf32, #tpu.memory_space<vmem>>, %arg11: memref<1x256xf32, #tpu.memory_space<vmem>>, %arg12: memref<1x256xf32, #tpu.memory_space<vmem>>, %arg13: memref<32x256xf32, #tpu.memory_space<vmem>>) attributes {dimension_semantics = [], scalar_prefetch = 0 : i64, scratch_operands = 0 : i64, tpu.core_type = #tpu.core_type<tc>} {
    %c0 = arith.constant 0 : index
    %c0_0 = arith.constant 0 : index
    %0 = vector.load %arg6[%c0, %c0_0] : memref<256x256xf32, #tpu.memory_space<vmem>>, vector<256x256xf32>
    %1 = tpu.iota {dimensions = array<i32: 0>} : vector<32x256xi32>
    %c16_i32 = arith.constant 16 : i32
    %c0_i32 = arith.constant 0 : i32
    %2 = arith.cmpi eq, %c16_i32, %c0_i32 : i32
    %c1_i32 = arith.constant 1 : i32
    %3 = arith.select %2, %c1_i32, %c16_i32 : i32
    %4 = vector.broadcast %3 : i32 to vector<32x256xi32>
    %5 = arith.remsi %1, %4 : vector<32x256xi32>
    %c0_i32_1 = arith.constant 0 : i32
    %6 = vector.broadcast %c0_i32_1 : i32 to vector<32x256xi32>
    %7 = arith.cmpi ne, %5, %6 : vector<32x256xi32>
    %c0_i32_2 = arith.constant 0 : i32
    %8 = vector.broadcast %c0_i32_2 : i32 to vector<32x256xi32>
    %9 = arith.cmpi slt, %5, %8 : vector<32x256xi32>
    %c0_i32_3 = arith.constant 0 : i32
    %10 = arith.cmpi slt, %3, %c0_i32_3 : i32
    %11 = vector.broadcast %10 : i1 to vector<32x256xi1>
    %12 = vector.broadcast %11 : vector<32x256xi1> to vector<32x256xi1>
    %13 = arith.xori %9, %12 : vector<32x256xi1>
    %14 = arith.andi %13, %7 : vector<32x256xi1>
    %15 = vector.broadcast %3 : i32 to vector<32x256xi32>
    %16 = arith.addi %5, %15 : vector<32x256xi32>
    %17 = arith.select %14, %16, %5 : vector<32x256xi1>, vector<32x256xi32>
    %c0_4 = arith.constant 0 : index
    %c0_5 = arith.constant 0 : index
    %18 = vector.load %arg0[%c0_4, %c0_5] : memref<32x256xf32, #tpu.memory_space<vmem>>, vector<32x256xf32>
    %19 = arith.truncf %18 : vector<32x256xf32> to vector<32x256xbf16>
    %c0_6 = arith.constant 0 : index
    %c0_7 = arith.constant 0 : index
    %20 = vector.load %arg1[%c0_6, %c0_7] : memref<256x256xbf16, #tpu.memory_space<vmem>>, vector<256x256xbf16>
    %cst = arith.constant dense<0.000000e+00> : vector<32x256xf32>
    %21 = tpu.matmul %19, %20, %cst {dimension_numbers = #tpu.dot_dimension_numbers<[1], [0], [0], [1], [0, 0, 1, 1], [], []>} : vector<32x256xbf16>, vector<256x256xbf16>, vector<32x256xf32> -> vector<32x256xf32>
    %c0_8 = arith.constant 0 : index
    %c0_9 = arith.constant 0 : index
    %22 = vector.load %arg7[%c0_8, %c0_9] : memref<1x256xf32, #tpu.memory_space<vmem>>, vector<1x256xf32>
    %c0_10 = arith.constant 0 : index
    %c0_11 = arith.constant 0 : index
    %23 = vector.load %arg8[%c0_10, %c0_11] : memref<1x256xf32, #tpu.memory_space<vmem>>, vector<1x256xf32>
    %cst_12 = arith.constant dense<0.000000e+00> : vector<256xf32>
    %24 = vector.multi_reduction <add>, %21, %cst_12 [0] : vector<32x256xf32> to vector<256xf32>
    %25 = vector.shape_cast %24 : vector<256xf32> to vector<1x256xf32>
    %26 = arith.mulf %21, %21 : vector<32x256xf32>
    %cst_13 = arith.constant dense<0.000000e+00> : vector<256xf32>
    %27 = vector.multi_reduction <add>, %26, %cst_13 [0] : vector<32x256xf32> to vector<256xf32>
    %28 = vector.shape_cast %27 : vector<256xf32> to vector<1x256xf32>
    %29 = tpu.concatenate %25, %28 in 0 : vector<1x256xf32>, vector<1x256xf32> -> vector<2x256xf32>
    %cst_14 = arith.constant dense<0.000000e+00> : vector<2x256xf32>
    %30 = tpu.matmul %29, %0, %cst_14 {dimension_numbers = #tpu.dot_dimension_numbers<[1], [0], [0], [1], [0, 0, 1, 1], [], []>} : vector<2x256xf32>, vector<256x256xf32>, vector<2x256xf32> -> vector<2x256xf32>
    %31 = vector.extract_strided_slice %30 {offsets = [0, 0], sizes = [1, 256], strides = [1, 1]} : vector<2x256xf32> to vector<1x256xf32>
    %32 = vector.extract_strided_slice %30 {offsets = [1, 0], sizes = [1, 256], strides = [1, 1]} : vector<2x256xf32> to vector<1x256xf32>
    %33 = arith.mulf %31, %31 : vector<1x256xf32>
    %34 = arith.subf %32, %33 : vector<1x256xf32>
    %cst_15 = arith.constant 9.99999974E-6 : f32
    %35 = vector.broadcast %cst_15 : f32 to vector<1x256xf32>
    %36 = arith.addf %34, %35 : vector<1x256xf32>
    %37 = math.rsqrt %36 : vector<1x256xf32>
    %38 = arith.mulf %22, %37 : vector<1x256xf32>
    %39 = vector.broadcast %31 : vector<1x256xf32> to vector<32x256xf32>
    %40 = arith.subf %21, %39 : vector<32x256xf32>
    %41 = vector.broadcast %38 : vector<1x256xf32> to vector<32x256xf32>
    %42 = arith.mulf %40, %41 : vector<32x256xf32>
    %43 = vector.broadcast %23 : vector<1x256xf32> to vector<32x256xf32>
    %44 = arith.addf %42, %43 : vector<32x256xf32>
    %cst_16 = arith.constant 0.000000e+00 : f32
    %45 = vector.broadcast %cst_16 : f32 to vector<32x256xf32>
    %46 = arith.maximumf %44, %45 : vector<32x256xf32>
    %c0_i32_17 = arith.constant 0 : i32
    %47 = vector.broadcast %c0_i32_17 : i32 to vector<32x256xi32>
    %48 = arith.cmpi ne, %17, %47 : vector<32x256xi32>
    %c1_i32_18 = arith.constant 1 : i32
    %49 = tpu.dynamic_rotate %46 by %c1_i32_18 dim 0 : vector<32x256xf32>, i32 -> vector<32x256xf32>
    %cst_19 = arith.constant 0.000000e+00 : f32
    %50 = vector.broadcast %cst_19 : f32 to vector<32x256xf32>
    %51 = arith.select %48, %49, %50 : vector<32x256xi1>, vector<32x256xf32>
    %52 = arith.truncf %51 : vector<32x256xf32> to vector<32x256xbf16>
    %c15_i32 = arith.constant 15 : i32
    %53 = vector.broadcast %c15_i32 : i32 to vector<32x256xi32>
    %54 = arith.cmpi ne, %17, %53 : vector<32x256xi32>
    %c31_i32 = arith.constant 31 : i32
    %55 = tpu.dynamic_rotate %46 by %c31_i32 dim 0 : vector<32x256xf32>, i32 -> vector<32x256xf32>
    %cst_20 = arith.constant 0.000000e+00 : f32
    %56 = vector.broadcast %cst_20 : f32 to vector<32x256xf32>
    %57 = arith.select %54, %55, %56 : vector<32x256xi1>, vector<32x256xf32>
    %58 = arith.truncf %57 : vector<32x256xf32> to vector<32x256xbf16>
    %59 = arith.truncf %46 : vector<32x256xf32> to vector<32x256xbf16>
    %c0_21 = arith.constant 0 : index
    %c0_22 = arith.constant 0 : index
    %60 = vector.load %arg2[%c0_21, %c0_22] : memref<256x256xbf16, #tpu.memory_space<vmem>>, vector<256x256xbf16>
    %cst_23 = arith.constant dense<0.000000e+00> : vector<32x256xf32>
    %61 = tpu.matmul %52, %60, %cst_23 {dimension_numbers = #tpu.dot_dimension_numbers<[1], [0], [0], [1], [0, 0, 1, 1], [], []>} : vector<32x256xbf16>, vector<256x256xbf16>, vector<32x256xf32> -> vector<32x256xf32>
    %c0_24 = arith.constant 0 : index
    %c0_25 = arith.constant 0 : index
    %62 = vector.load %arg3[%c0_24, %c0_25] : memref<256x256xbf16, #tpu.memory_space<vmem>>, vector<256x256xbf16>
    %cst_26 = arith.constant dense<0.000000e+00> : vector<32x256xf32>
    %63 = tpu.matmul %59, %62, %cst_26 {dimension_numbers = #tpu.dot_dimension_numbers<[1], [0], [0], [1], [0, 0, 1, 1], [], []>} : vector<32x256xbf16>, vector<256x256xbf16>, vector<32x256xf32> -> vector<32x256xf32>
    %64 = arith.addf %61, %63 : vector<32x256xf32>
    %c0_27 = arith.constant 0 : index
    %c0_28 = arith.constant 0 : index
    %65 = vector.load %arg4[%c0_27, %c0_28] : memref<256x256xbf16, #tpu.memory_space<vmem>>, vector<256x256xbf16>
    %cst_29 = arith.constant dense<0.000000e+00> : vector<32x256xf32>
    %66 = tpu.matmul %58, %65, %cst_29 {dimension_numbers = #tpu.dot_dimension_numbers<[1], [0], [0], [1], [0, 0, 1, 1], [], []>} : vector<32x256xbf16>, vector<256x256xbf16>, vector<32x256xf32> -> vector<32x256xf32>
    %67 = arith.addf %64, %66 : vector<32x256xf32>
    %c0_30 = arith.constant 0 : index
    %c0_31 = arith.constant 0 : index
    %68 = vector.load %arg9[%c0_30, %c0_31] : memref<1x256xf32, #tpu.memory_space<vmem>>, vector<1x256xf32>
    %c0_32 = arith.constant 0 : index
    %c0_33 = arith.constant 0 : index
    %69 = vector.load %arg10[%c0_32, %c0_33] : memref<1x256xf32, #tpu.memory_space<vmem>>, vector<1x256xf32>
    %cst_34 = arith.constant dense<0.000000e+00> : vector<256xf32>
    %70 = vector.multi_reduction <add>, %67, %cst_34 [0] : vector<32x256xf32> to vector<256xf32>
    %71 = vector.shape_cast %70 : vector<256xf32> to vector<1x256xf32>
    %72 = arith.mulf %67, %67 : vector<32x256xf32>
    %cst_35 = arith.constant dense<0.000000e+00> : vector<256xf32>
    %73 = vector.multi_reduction <add>, %72, %cst_35 [0] : vector<32x256xf32> to vector<256xf32>
    %74 = vector.shape_cast %73 : vector<256xf32> to vector<1x256xf32>
    %75 = tpu.concatenate %71, %74 in 0 : vector<1x256xf32>, vector<1x256xf32> -> vector<2x256xf32>
    %cst_36 = arith.constant dense<0.000000e+00> : vector<2x256xf32>
    %76 = tpu.matmul %75, %0, %cst_36 {dimension_numbers = #tpu.dot_dimension_numbers<[1], [0], [0], [1], [0, 0, 1, 1], [], []>} : vector<2x256xf32>, vector<256x256xf32>, vector<2x256xf32> -> vector<2x256xf32>
    %77 = vector.extract_strided_slice %76 {offsets = [0, 0], sizes = [1, 256], strides = [1, 1]} : vector<2x256xf32> to vector<1x256xf32>
    %78 = vector.extract_strided_slice %76 {offsets = [1, 0], sizes = [1, 256], strides = [1, 1]} : vector<2x256xf32> to vector<1x256xf32>
    %79 = arith.mulf %77, %77 : vector<1x256xf32>
    %80 = arith.subf %78, %79 : vector<1x256xf32>
    %cst_37 = arith.constant 9.99999974E-6 : f32
    %81 = vector.broadcast %cst_37 : f32 to vector<1x256xf32>
    %82 = arith.addf %80, %81 : vector<1x256xf32>
    %83 = math.rsqrt %82 : vector<1x256xf32>
    %84 = arith.mulf %68, %83 : vector<1x256xf32>
    %85 = vector.broadcast %77 : vector<1x256xf32> to vector<32x256xf32>
    %86 = arith.subf %67, %85 : vector<32x256xf32>
    %87 = vector.broadcast %84 : vector<1x256xf32> to vector<32x256xf32>
    %88 = arith.mulf %86, %87 : vector<32x256xf32>
    %89 = vector.broadcast %69 : vector<1x256xf32> to vector<32x256xf32>
    %90 = arith.addf %88, %89 : vector<32x256xf32>
    %cst_38 = arith.constant 0.000000e+00 : f32
    %91 = vector.broadcast %cst_38 : f32 to vector<32x256xf32>
    %92 = arith.maximumf %90, %91 : vector<32x256xf32>
    %93 = arith.truncf %92 : vector<32x256xf32> to vector<32x256xbf16>
    %c0_39 = arith.constant 0 : index
    %c0_40 = arith.constant 0 : index
    %94 = vector.load %arg5[%c0_39, %c0_40] : memref<256x256xbf16, #tpu.memory_space<vmem>>, vector<256x256xbf16>
    %cst_41 = arith.constant dense<0.000000e+00> : vector<32x256xf32>
    %95 = tpu.matmul %93, %94, %cst_41 {dimension_numbers = #tpu.dot_dimension_numbers<[1], [0], [0], [1], [0, 0, 1, 1], [], []>} : vector<32x256xbf16>, vector<256x256xbf16>, vector<32x256xf32> -> vector<32x256xf32>
    %c0_42 = arith.constant 0 : index
    %c0_43 = arith.constant 0 : index
    %96 = vector.load %arg11[%c0_42, %c0_43] : memref<1x256xf32, #tpu.memory_space<vmem>>, vector<1x256xf32>
    %c0_44 = arith.constant 0 : index
    %c0_45 = arith.constant 0 : index
    %97 = vector.load %arg12[%c0_44, %c0_45] : memref<1x256xf32, #tpu.memory_space<vmem>>, vector<1x256xf32>
    %cst_46 = arith.constant dense<0.000000e+00> : vector<256xf32>
    %98 = vector.multi_reduction <add>, %95, %cst_46 [0] : vector<32x256xf32> to vector<256xf32>
    %99 = vector.shape_cast %98 : vector<256xf32> to vector<1x256xf32>
    %100 = arith.mulf %95, %95 : vector<32x256xf32>
    %cst_47 = arith.constant dense<0.000000e+00> : vector<256xf32>
    %101 = vector.multi_reduction <add>, %100, %cst_47 [0] : vector<32x256xf32> to vector<256xf32>
    %102 = vector.shape_cast %101 : vector<256xf32> to vector<1x256xf32>
    %103 = tpu.concatenate %99, %102 in 0 : vector<1x256xf32>, vector<1x256xf32> -> vector<2x256xf32>
    %cst_48 = arith.constant dense<0.000000e+00> : vector<2x256xf32>
    %104 = tpu.matmul %103, %0, %cst_48 {dimension_numbers = #tpu.dot_dimension_numbers<[1], [0], [0], [1], [0, 0, 1, 1], [], []>} : vector<2x256xf32>, vector<256x256xf32>, vector<2x256xf32> -> vector<2x256xf32>
    %105 = vector.extract_strided_slice %104 {offsets = [0, 0], sizes = [1, 256], strides = [1, 1]} : vector<2x256xf32> to vector<1x256xf32>
    %106 = vector.extract_strided_slice %104 {offsets = [1, 0], sizes = [1, 256], strides = [1, 1]} : vector<2x256xf32> to vector<1x256xf32>
    %107 = arith.mulf %105, %105 : vector<1x256xf32>
    %108 = arith.subf %106, %107 : vector<1x256xf32>
    %cst_49 = arith.constant 9.99999974E-6 : f32
    %109 = vector.broadcast %cst_49 : f32 to vector<1x256xf32>
    %110 = arith.addf %108, %109 : vector<1x256xf32>
    %111 = math.rsqrt %110 : vector<1x256xf32>
    %112 = arith.mulf %96, %111 : vector<1x256xf32>
    %113 = vector.broadcast %105 : vector<1x256xf32> to vector<32x256xf32>
    %114 = arith.subf %95, %113 : vector<32x256xf32>
    %115 = vector.broadcast %112 : vector<1x256xf32> to vector<32x256xf32>
    %116 = arith.mulf %114, %115 : vector<32x256xf32>
    %117 = vector.broadcast %97 : vector<1x256xf32> to vector<32x256xf32>
    %118 = arith.addf %116, %117 : vector<32x256xf32>
    %c0_50 = arith.constant 0 : index
    %c0_51 = arith.constant 0 : index
    %119 = vector.load %arg0[%c0_50, %c0_51] : memref<32x256xf32, #tpu.memory_space<vmem>>, vector<32x256xf32>
    %120 = arith.addf %118, %119 : vector<32x256xf32>
    %cst_52 = arith.constant 0.000000e+00 : f32
    %121 = vector.broadcast %cst_52 : f32 to vector<32x256xf32>
    %122 = arith.maximumf %120, %121 : vector<32x256xf32>
    %c0_53 = arith.constant 0 : index
    %c0_54 = arith.constant 0 : index
    %123 = vector.load %arg13[%c0_53, %c0_54] : memref<32x256xf32, #tpu.memory_space<vmem>>, vector<32x256xf32>
    tpu.vector_store %arg13[%c0_53, %c0_54], %122 {strides = array<i32>} : memref<32x256xf32, #tpu.memory_space<vmem>>, vector<32x256xf32>,
    return
  }
}

</mosaic_0001>

<llo_original>
// kernel: fwd.1
$region0: #{fwd.1}
  #allocation0 [shape = 'u32[]', space=smem, size = 0x4, offset = 0x4, fixed_abs, tag = 'smem constant byte address 0x4 - core index']
  #allocation1 [shape = 'u32[144,128]{1,0:T(1,128)}', space=vmem, size = 0x12000, scoped, tag = 'internal scratch']
  %s0 = inlined_call_operand.vmem [shape: f32[32,256], index: 0, kind: input, shape index: {}]
  %s1 = inlined_call_operand.vmem [shape: bf16[256,256], index: 1, kind: input, shape index: {}]
  %s2 = inlined_call_operand.vmem [shape: bf16[256,256], index: 2, kind: input, shape index: {}]
  %s3 = inlined_call_operand.vmem [shape: bf16[256,256], index: 3, kind: input, shape index: {}]
  %s4 = inlined_call_operand.vmem [shape: bf16[256,256], index: 4, kind: input, shape index: {}]
  %s5 = inlined_call_operand.vmem [shape: bf16[256,256], index: 5, kind: input, shape index: {}]
  %s6 = inlined_call_operand.vmem [shape: f32[256,256], index: 6, kind: input, shape index: {}]
  %s7 = inlined_call_operand.vmem [shape: f32[1,256], index: 7, kind: input, shape index: {}]
  %s8 = inlined_call_operand.vmem [shape: f32[1,256], index: 8, kind: input, shape index: {}]
  %s9 = inlined_call_operand.vmem [shape: f32[1,256], index: 9, kind: input, shape index: {}]
  %s10 = inlined_call_operand.vmem [shape: f32[1,256], index: 10, kind: input, shape index: {}]
  %s11 = inlined_call_operand.vmem [shape: f32[1,256], index: 11, kind: input, shape index: {}]
  %s12 = inlined_call_operand.vmem [shape: f32[1,256], index: 12, kind: input, shape index: {}]
  %s13 = inlined_call_operand.vmem [shape: f32[32,256], index: 13, kind: output, shape index: {}]
  %s14 = sld [smem:[#allocation0]]
  $region62: #{fwd.1} parent=0
    _
  %s16 = ssub.s32 1, %s14
  %s17 = scalar_select 0, %s16, %s14
  // Predicated region
  $region2: #{fwd.1} parent=0 // pred_check
    _
  $region3: #{fwd.1} parent=0 // pred_check_branch
    %19 = sbr.rel (0) target = $region5
  $region4: #{fwd.1} parent=0 // pred_region
    _
  $region5: #{fwd.1} parent=0 // pred_fallthru
    _
  // Predicated region
  $region6: #{fwd.1} parent=0 // pred_check
    _
  $region7: #{fwd.1} parent=0 // pred_check_branch
    %21 = sbr.rel (0) target = $region9
  $region8: #{fwd.1} parent=0 // pred_region
    _
  $region9: #{fwd.1} parent=0 // pred_fallthru
    _
  // Predicated region
  $region10: #{fwd.1} parent=0 // pred_check
    _
  $region11: #{fwd.1} parent=0 // pred_check_branch
    %23 = sbr.rel (0) target = $region13
  $region12: #{fwd.1} parent=0 // pred_region
    _
  $region13: #{fwd.1} parent=0 // pred_fallthru
    _
  // Predicated region
  $region14: #{fwd.1} parent=0 // pred_check
    _
  $region15: #{fwd.1} parent=0 // pred_check_branch
    %25 = sbr.rel (0) target = $region17
  $region16: #{fwd.1} parent=0 // pred_region
    _
  $region17: #{fwd.1} parent=0 // pred_fallthru
    _
  // Predicated region
  $region18: #{fwd.1} parent=0 // pred_check
    _
  $region19: #{fwd.1} parent=0 // pred_check_branch
    %27 = sbr.rel (0) target = $region21
  $region20: #{fwd.1} parent=0 // pred_region
    _
  $region21: #{fwd.1} parent=0 // pred_fallthru
    _
  // Predicated region
  $region22: #{fwd.1} parent=0 // pred_check
    _
  $region23: #{fwd.1} parent=0 // pred_check_branch
    %29 = sbr.rel (0) target = $region25
  $region24: #{fwd.1} parent=0 // pred_region
    _
  $region25: #{fwd.1} parent=0 // pred_fallthru
    _
  // Predicated region
  $region26: #{fwd.1} parent=0 // pred_check
    _
  $region27: #{fwd.1} parent=0 // pred_check_branch
    %31 = sbr.rel (0) target = $region29
  $region28: #{fwd.1} parent=0 // pred_region
    _
  $region29: #{fwd.1} parent=0 // pred_fallthru
    _
  // Predicated region
  $region30: #{fwd.1} parent=0 // pred_check
    _
  $region31: #{fwd.1} parent=0 // pred_check_branch
    %33 = sbr.rel (0) target = $region33
  $region32: #{fwd.1} parent=0 // pred_region
    _
  $region33: #{fwd.1} parent=0 // pred_fallthru
    _
  // Predicated region
  $region34: #{fwd.1} parent=0 // pred_check
    _
  $region35: #{fwd.1} parent=0 // pred_check_branch
    %35 = sbr.rel (0) target = $region37
  $region36: #{fwd.1} parent=0 // pred_region
    _
  $region37: #{fwd.1} parent=0 // pred_fallthru
    _
  // Predicated region
  $region38: #{fwd.1} parent=0 // pred_check
    _
  $region39: #{fwd.1} parent=0 // pred_check_branch
    %37 = sbr.rel (0) target = $region41
  $region40: #{fwd.1} parent=0 // pred_region
    _
  $region41: #{fwd.1} parent=0 // pred_fallthru
    _
  // Predicated region
  $region42: #{fwd.1} parent=0 // pred_check
    _
  $region43: #{fwd.1} parent=0 // pred_check_branch
    %39 = sbr.rel (0) target = $region45
  $region44: #{fwd.1} parent=0 // pred_region
    _
  $region45: #{fwd.1} parent=0 // pred_fallthru
    _
  // Predicated region
  $region46: #{fwd.1} parent=0 // pred_check
    _
  $region47: #{fwd.1} parent=0 // pred_check_branch
    %41 = sbr.rel (0) target = $region49
  $region48: #{fwd.1} parent=0 // pred_region
    _
  $region49: #{fwd.1} parent=0 // pred_fallthru
    _
  // Predicated region
  $region50: #{fwd.1} parent=0 // pred_check
    _
  $region51: #{fwd.1} parent=0 // pred_check_branch
    %43 = sbr.rel (0) target = $region53
  $region52: #{fwd.1} parent=0 // pred_region
    _
  $region53: #{fwd.1} parent=0 // pred_fallthru
    _
  %v44 = vld [vmem:[%s6] sm:$0xff]
  %v45 = vld [vmem:[%s6 + $0x8] sm:$0xff]
  %v46 = vld [vmem:[%s6 + $0x10] sm:$0xff]
  %v47 = vld [vmem:[%s6 + $0x18] sm:$0xff]
  %v48 = vld [vmem:[%s6 + $0x20] sm:$0xff]
  %v49 = vld [vmem:[%s6 + $0x28] sm:$0xff]
  %v50 = vld [vmem:[%s6 + $0x30] sm:$0xff]
  %v51 = vld [vmem:[%s6 + $0x38] sm:$0xff]
  %v52 = vld [vmem:[%s6 + $0x40] sm:$0xff]
  %v53 = vld [vmem:[%s6 + $0x48] sm:$0xff]
  %v54 = vld [vmem:[%s6 + $0x50] sm:$0xff]
  %v55 = vld [vmem:[%s6 + $0x58] sm:$0xff]
  %v56 = vld [vmem:[%s6 + $0x60] sm:$0xff]
  %v57 = vld [vmem:[%s6 + $0x68] sm:$0xff]
  %v58 = vld [vmem:[%s6 + $0x70] sm:$0xff]
  %v59 = vld [vmem:[%s6 + $0x78] sm:$0xff]
  %v60 = vld [vmem:[%s6 + $0x80] sm:$0xff]
  %v61 = vld [vmem:[%s6 + $0x88] sm:$0xff]
  %v62 = vld [vmem:[%s6 + $0x90] sm:$0xff]
  %v63 = vld [vmem:[%s6 + $0x98] sm:$0xff]
  %v64 = vld [vmem:[%s6 + $0xa0] sm:$0xff]
  %v65 = vld [vmem:[%s6 + $0xa8] sm:$0xff]
  %v66 = vld [vmem:[%s6 + $0xb0] sm:$0xff]
  %v67 = vld [vmem:[%s6 + $0xb8] sm:$0xff]
  %v68 = vld [vmem:[%s6 + $0xc0] sm:$0xff]
  %v69 = vld [vmem:[%s6 + $0xc8] sm:$0xff]
  %v70 = vld [vmem:[%s6 + $0xd0] sm:$0xff]
  %v71 = vld [vmem:[%s6 + $0xd8] sm:$0xff]
  %v72 = vld [vmem:[%s6 + $0xe0] sm:$0xff]
  %v73 = vld [vmem:[%s6 + $0xe8] sm:$0xff]
  %v74 = vld [vmem:[%s6 + $0xf0] sm:$0xff]
  %v75 = vld [vmem:[%s6 + $0xf8] sm:$0xff]
  %v76 = vld [vmem:[%s6 + $0x100] sm:$0xff]
  %v77 = vld [vmem:[%s6 + $0x108] sm:$0xff]
  %v78 = vld [vmem:[%s6 + $0x110] sm:$0xff]
  %v79 = vld [vmem:[%s6 + $0x118] sm:$0xff]
  %v80 = vld [vmem:[%s6 + $0x120] sm:$0xff]
  %v81 = vld [vmem:[%s6 + $0x128] sm:$0xff]
  %v82 = vld [vmem:[%s6 + $0x130] sm:$0xff]
  %v83 = vld [vmem:[%s6 + $0x138] sm:$0xff]
  %v84 = vld [vmem:[%s6 + $0x140] sm:$0xff]
  %v85 = vld [vmem:[%s6 + $0x148] sm:$0xff]
  %v86 = vld [vmem:[%s6 + $0x150] sm:$0xff]
  %v87 = vld [vmem:[%s6 + $0x158] sm:$0xff]
  %v88 = vld [vmem:[%s6 + $0x160] sm:$0xff]
  %v89 = vld [vmem:[%s6 + $0x168] sm:$0xff]
  %v90 = vld [vmem:[%s6 + $0x170] sm:$0xff]
  %v91 = vld [vmem:[%s6 + $0x178] sm:$0xff]
  %v92 = vld [vmem:[%s6 + $0x180] sm:$0xff]
  %v93 = vld [vmem:[%s6 + $0x188] sm:$0xff]
  %v94 = vld [vmem:[%s6 + $0x190] sm:$0xff]
  %v95 = vld [vmem:[%s6 + $0x198] sm:$0xff]
  %v96 = vld [vmem:[%s6 + $0x1a0] sm:$0xff]
  %v97 = vld [vmem:[%s6 + $0x1a8] sm:$0xff]
  %v98 = vld [vmem:[%s6 + $0x1b0] sm:$0xff]
  %v99 = vld [vmem:[%s6 + $0x1b8] sm:$0xff]
  %v100 = vld [vmem:[%s6 + $0x1c0] sm:$0xff]
  %v101 = vld [vmem:[%s6 + $0x1c8] sm:$0xff]
  %v102 = vld [vmem:[%s6 + $0x1d0] sm:$0xff]
  %v103 = vld [vmem:[%s6 + $0x1d8] sm:$0xff]
  %v104 = vld [vmem:[%s6 + $0x1e0] sm:$0xff]
  %v105 = vld [vmem:[%s6 + $0x1e8] sm:$0xff]
  %v106 = vld [vmem:[%s6 + $0x1f0] sm:$0xff]
  %v107 = vld [vmem:[%s6 + $0x1f8] sm:$0xff]
  %v108 = vlaneseq
  %v109 = vshrl.u32 %v108, 7
  %v110 = vadd.s32 %v109, 8
  %v111 = vadd.s32 %v109, 16
  %v112 = vadd.s32 %v109, 24
  %vm113 = vcmp.lt.s32.totalorder %v109, 0
  %v114 = vsub.s32 0, %v109
  %v115 = vsel %vm113, %v114, %v109
  %v116 = vshrl.u32 %v115, 4
  %v117 = vand.u32 %v115, 15
  %v118 = vsub.s32 0, %v117
  %v119 = vsel %vm113, %v118, %v117
  %vm120 = vcmp.lt.s32.totalorder %v110, 0
  %v121 = vsub.s32 0, %v110
  %v122 = vsel %vm120, %v121, %v110
  %v123 = vshrl.u32 %v122, 4
  %v124 = vand.u32 %v122, 15
  %v125 = vsub.s32 0, %v124
  %v126 = vsel %vm120, %v125, %v124
  %vm127 = vcmp.lt.s32.totalorder %v111, 0
  %v128 = vsub.s32 0, %v111
  %v129 = vsel %vm127, %v128, %v111
  %v130 = vshrl.u32 %v129, 4
  %v131 = vand.u32 %v129, 15
  %v132 = vsub.s32 0, %v131
  %v133 = vsel %vm127, %v132, %v131
  %vm134 = vcmp.lt.s32.totalorder %v112, 0
  %v135 = vsub.s32 0, %v112
  %v136 = vsel %vm134, %v135, %v112
  %v137 = vshrl.u32 %v136, 4
  %v138 = vand.u32 %v136, 15
  %v139 = vsub.s32 0, %v138
  %v140 = vsel %vm134, %v139, %v138
  %vm141 = vcmp.ne.s32.totalorder %v119, 0
  %vm142 = vcmp.ne.s32.totalorder %v126, 0
  %vm143 = vcmp.ne.s32.totalorder %v133, 0
  %vm144 = vcmp.ne.s32.totalorder %v140, 0
  %vm145 = vcmp.lt.s32.totalorder %v119, 0
  %vm146 = vcmp.lt.s32.totalorder %v126, 0
  %vm147 = vcmp.lt.s32.totalorder %v133, 0
  %vm148 = vcmp.lt.s32.totalorder %v140, 0
  %vm149 = vmand %vm145, %vm141
  %vm150 = vmand %vm146, %vm142
  %vm151 = vmand %vm147, %vm143
  %vm152 = vmand %vm148, %vm144
  %v153 = vadd.s32 %v119, 16
  %v154 = vadd.s32 %v126, 16
  %v155 = vadd.s32 %v133, 16
  %v156 = vadd.s32 %v140, 16
  %v157 = vsel %vm149, %v153, %v119
  %v158 = vsel %vm150, %v154, %v126
  %v159 = vsel %vm151, %v155, %v133
  %v160 = vsel %vm152, %v156, %v140
  %v161 = vld [vmem:[%s0] sm:$0xff]
  %v162 = vld [vmem:[%s0 + $0x8] sm:$0xff]
  %v163 = vld [vmem:[%s0 + $0x10] sm:$0xff]
  %v164 = vld [vmem:[%s0 + $0x18] sm:$0xff]
  %v165 = vld [vmem:[%s0 + $0x20] sm:$0xff]
  %v166 = vld [vmem:[%s0 + $0x28] sm:$0xff]
  %v167 = vld [vmem:[%s0 + $0x30] sm:$0xff]
  %v168 = vld [vmem:[%s0 + $0x38] sm:$0xff]
  %v169 = vpack.c.bf16 %v163, %v161
  %v170 = vpack.c.bf16 %v164, %v162
  %v171 = vpack.c.bf16 %v167, %v165
  %v172 = vpack.c.bf16 %v168, %v166
  %v173 = vld [vmem:[%s1] sm:$0xff]
  %v174 = vld [vmem:[%s1 + $0x8] sm:$0xff]
  %v175 = vld [vmem:[%s1 + $0x10] sm:$0xff]
  %v176 = vld [vmem:[%s1 + $0x18] sm:$0xff]
  %v177 = vld [vmem:[%s1 + $0x20] sm:$0xff]
  %v178 = vld [vmem:[%s1 + $0x28] sm:$0xff]
  %v179 = vld [vmem:[%s1 + $0x30] sm:$0xff]
  %v180 = vld [vmem:[%s1 + $0x38] sm:$0xff]
  %v181 = vld [vmem:[%s1 + $0x40] sm:$0xff]
  %v182 = vld [vmem:[%s1 + $0x48] sm:$0xff]
  %v183 = vld [vmem:[%s1 + $0x50] sm:$0xff]
  %v184 = vld [vmem:[%s1 + $0x58] sm:$0xff]
  %v185 = vld [vmem:[%s1 + $0x60] sm:$0xff]
  %v186 = vld [vmem:[%s1 + $0x68] sm:$0xff]
  %v187 = vld [vmem:[%s1 + $0x70] sm:$0xff]
  %v188 = vld [vmem:[%s1 + $0x78] sm:$0xff]
  %v189 = vld [vmem:[%s1 + $0x80] sm:$0xff]
  %v190 = vld [vmem:[%s1 + $0x88] sm:$0xff]
  %v191 = vld [vmem:[%s1 + $0x90] sm:$0xff]
  %v192 = vld [vmem:[%s1 + $0x98] sm:$0xff]
  %v193 = vld [vmem:[%s1 + $0xa0] sm:$0xff]
  %v194 = vld [vmem:[%s1 + $0xa8] sm:$0xff]
  %v195 = vld [vmem:[%s1 + $0xb0] sm:$0xff]
  %v196 = vld [vmem:[%s1 + $0xb8] sm:$0xff]
  %v197 = vld [vmem:[%s1 + $0xc0] sm:$0xff]
  %v198 = vld [vmem:[%s1 + $0xc8] sm:$0xff]
  %v199 = vld [vmem:[%s1 + $0xd0] sm:$0xff]
  %v200 = vld [vmem:[%s1 + $0xd8] sm:$0xff]
  %v201 = vld [vmem:[%s1 + $0xe0] sm:$0xff]
  %v202 = vld [vmem:[%s1 + $0xe8] sm:$0xff]
  %v203 = vld [vmem:[%s1 + $0xf0] sm:$0xff]
  %v204 = vld [vmem:[%s1 + $0xf8] sm:$0xff]
  %v237 = vunpack.c.l.b16 %v173
  %v238 = vunpack.c.h.b16 %v173
  %v239 = vunpack.c.l.b16 %v174
  %v240 = vunpack.c.h.b16 %v174
  %v241 = vunpack.c.l.b16 %v175
  %v242 = vunpack.c.h.b16 %v175
  %v243 = vunpack.c.l.b16 %v176
  %v244 = vunpack.c.h.b16 %v176
  %v245 = vunpack.c.l.b16 %v177
  %v246 = vunpack.c.h.b16 %v177
  %v247 = vunpack.c.l.b16 %v178
  %v248 = vunpack.c.h.b16 %v178
  %v249 = vunpack.c.l.b16 %v179
  %v250 = vunpack.c.h.b16 %v179
  %v251 = vunpack.c.l.b16 %v180
  %v252 = vunpack.c.h.b16 %v180
  %v253 = vunpack.c.l.b16 %v181
  %v254 = vunpack.c.h.b16 %v181
  %v255 = vunpack.c.l.b16 %v182
  %v256 = vunpack.c.h.b16 %v182
  %v257 = vunpack.c.l.b16 %v183
  %v258 = vunpack.c.h.b16 %v183
  %v259 = vunpack.c.l.b16 %v184
  %v260 = vunpack.c.h.b16 %v184
  %v261 = vunpack.c.l.b16 %v185
  %v262 = vunpack.c.h.b16 %v185
  %v263 = vunpack.c.l.b16 %v186
  %v264 = vunpack.c.h.b16 %v186
  %v265 = vunpack.c.l.b16 %v187
  %v266 = vunpack.c.h.b16 %v187
  %v267 = vunpack.c.l.b16 %v188
  %v268 = vunpack.c.h.b16 %v188
  %v269 = vunpack.c.l.b16 %v189
  %v270 = vunpack.c.h.b16 %v189
  %v271 = vunpack.c.l.b16 %v190
  %v272 = vunpack.c.h.b16 %v190
  %v273 = vunpack.c.l.b16 %v191
  %v274 = vunpack.c.h.b16 %v191
  %v275 = vunpack.c.l.b16 %v192
  %v276 = vunpack.c.h.b16 %v192
  %v277 = vunpack.c.l.b16 %v193
  %v278 = vunpack.c.h.b16 %v193
  %v279 = vunpack.c.l.b16 %v194
  %v280 = vunpack.c.h.b16 %v194
  %v281 = vunpack.c.l.b16 %v195
  %v282 = vunpack.c.h.b16 %v195
  %v283 = vunpack.c.l.b16 %v196
  %v284 = vunpack.c.h.b16 %v196
  %v285 = vunpack.c.l.b16 %v197
  %v286 = vunpack.c.h.b16 %v197
  %v287 = vunpack.c.l.b16 %v198
  %v288 = vunpack.c.h.b16 %v198
  %v289 = vunpack.c.l.b16 %v199
  %v290 = vunpack.c.h.b16 %v199
  %v291 = vunpack.c.l.b16 %v200
  %v292 = vunpack.c.h.b16 %v200
  %v293 = vunpack.c.l.b16 %v201
  %v294 = vunpack.c.h.b16 %v201
  %v295 = vunpack.c.l.b16 %v202
  %v296 = vunpack.c.h.b16 %v202
  %v297 = vunpack.c.l.b16 %v203
  %v298 = vunpack.c.h.b16 %v203
  %v299 = vunpack.c.l.b16 %v204
  %v300 = vunpack.c.h.b16 %v204
  %v301 = vpack.c.b16 %v239, %v237
  %v302 = vpack.c.b16 %v240, %v238
  %v303 = vpack.c.b16 %v243, %v241
  %v304 = vpack.c.b16 %v244, %v242
  %v305 = vpack.c.b16 %v247, %v245
  %v306 = vpack.c.b16 %v248, %v246
  %v307 = vpack.c.b16 %v251, %v249
  %v308 = vpack.c.b16 %v252, %v250
  %v309 = vpack.c.b16 %v255, %v253
  %v310 = vpack.c.b16 %v256, %v254
  %v311 = vpack.c.b16 %v259, %v257
  %v312 = vpack.c.b16 %v260, %v258
  %v313 = vpack.c.b16 %v263, %v261
  %v314 = vpack.c.b16 %v264, %v262
  %v315 = vpack.c.b16 %v267, %v265
  %v316 = vpack.c.b16 %v268, %v266
  %v317 = vpack.c.b16 %v271, %v269
  %v318 = vpack.c.b16 %v272, %v270
  %v319 = vpack.c.b16 %v275, %v273
  %v320 = vpack.c.b16 %v276, %v274
  %v321 = vpack.c.b16 %v279, %v277
  %v322 = vpack.c.b16 %v280, %v278
  %v323 = vpack.c.b16 %v283, %v281
  %v324 = vpack.c.b16 %v284, %v282
  %v325 = vpack.c.b16 %v287, %v285
  %v326 = vpack.c.b16 %v288, %v286
  %v327 = vpack.c.b16 %v291, %v289
  %v328 = vpack.c.b16 %v292, %v290
  %v329 = vpack.c.b16 %v295, %v293
  %v330 = vpack.c.b16 %v296, %v294
  %v331 = vpack.c.b16 %v299, %v297
  %v332 = vpack.c.b16 %v300, %v298
  %365 = vmatprep.subr.bf16.mxu0 %v302
  %366 = vmatpush1.bf16.msra.mxu0 %v301
  %367 = vmatprep.subr.bf16.mxu0 %v304
  %368 = vmatpush1.bf16.msra.mxu0 %v303
  %369 = vmatprep.subr.bf16.mxu0 %v306
  %370 = vmatpush1.bf16.msra.mxu0 %v305
  %371 = vmatprep.subr.bf16.mxu0 %v308
  %372 = vmatpush1.bf16.msra.mxu0 %v307
  %373 = vmatprep.subr.bf16.mxu0 %v310
  %374 = vmatpush1.bf16.msra.mxu0 %v309
  %375 = vmatprep.subr.bf16.mxu0 %v312
  %376 = vmatpush1.bf16.msra.mxu0 %v311
  %377 = vmatprep.subr.bf16.mxu0 %v314
  %378 = vmatpush1.bf16.msra.mxu0 %v313
  %379 = vmatprep.subr.bf16.mxu0 %v316
  %380 = vmatpush1.bf16.msra.mxu0 %v315
  %381 = vmatprep.subr.bf16.mxu0 %v318
  %382 = vmatpush1.bf16.msra.mxu0 %v317
  %383 = vmatprep.subr.bf16.mxu0 %v320
  %384 = vmatpush1.bf16.msra.mxu0 %v319
  %385 = vmatprep.subr.bf16.mxu0 %v322
  %386 = vmatpush1.bf16.msra.mxu0 %v321
  %387 = vmatprep.subr.bf16.mxu0 %v324
  %388 = vmatpush1.bf16.msra.mxu0 %v323
  %389 = vmatprep.subr.bf16.mxu0 %v326
  %390 = vmatpush1.bf16.msra.mxu0 %v325
  %391 = vmatprep.subr.bf16.mxu0 %v328
  %392 = vmatpush1.bf16.msra.mxu0 %v327
  %393 = vmatprep.subr.bf16.mxu0 %v330
  %394 = vmatpush1.bf16.msra.mxu0 %v329
  %395 = vmatprep.subr.bf16.mxu0 %v332
  %396 = vmatpush1.bf16.msra.mxu0 %v331
  %397 = vmatprep.mubr.bf16.mxu0 %v170
  %398 = vmatmul.mubr.bf16.gmra.mrb[0].mxu0 %v169
  %v399 = vpop.f32.mrb[0].mxu0
  %v400 = vadd.f32 0.0, %v399
  %v401 = vpop.f32.mrb[0].mxu0
  %v402 = vadd.f32 0.0, %v401
  %v403 = vpop.f32.mrb[0].mxu0
  %v404 = vadd.f32 0.0, %v403
  %v405 = vpop.f32.mrb[0].mxu0
  %v406 = vadd.f32 0.0, %v405
  %407 = vmatprep.mubr.bf16.mxu0 %v172
  %408 = vmatmul.mubr.bf16.gmra.mrb[0].mxu0 %v171
  %v409 = vpop.f32.mrb[0].mxu0
  %v410 = vadd.f32 0.0, %v409
  %v411 = vpop.f32.mrb[0].mxu0
  %v412 = vadd.f32 0.0, %v411
  %v413 = vpop.f32.mrb[0].mxu0
  %v414 = vadd.f32 0.0, %v413
  %v415 = vpop.f32.mrb[0].mxu0
  %v416 = vadd.f32 0.0, %v415
  %417 = vdwg.mxu0
  %v418 = vld [vmem:[%s7] sm:$0x3]
  %v419 = vld [vmem:[%s8] sm:$0x3]
  %v420 = vadd.f32 %v400, %v404
  %v421 = vadd.f32 %v420, %v410
  %v422 = vadd.f32 %v421, %v414
  %v423 = vrot.slane %v422, 4
  %v424 = vadd.f32 %v422, %v423
  %v425 = vrot.slane %v424, 2
  %v426 = vadd.f32 %v424, %v425
  %v427 = vrot.slane %v426, 1
  %v428 = vadd.f32 %v426, %v427
  %v429 = vadd.f32 %v402, %v406
  %v430 = vadd.f32 %v429, %v412
  %v431 = vadd.f32 %v430, %v416
  %v432 = vrot.slane %v431, 4
  %v433 = vadd.f32 %v431, %v432
  %v434 = vrot.slane %v433, 2
  %v435 = vadd.f32 %v433, %v434
  %v436 = vrot.slane %v435, 1
  %v437 = vadd.f32 %v435, %v436
  %v438 = vmul.f32 %v400, %v400
  %v439 = vmul.f32 %v402, %v402
  %v440 = vmul.f32 %v404, %v404
  %v441 = vmul.f32 %v406, %v406
  %v442 = vmul.f32 %v410, %v410
  %v443 = vmul.f32 %v412, %v412
  %v444 = vmul.f32 %v414, %v414
  %v445 = vmul.f32 %v416, %v416
  %v446 = vadd.f32 %v438, %v440
  %v447 = vadd.f32 %v446, %v442
  %v448 = vadd.f32 %v447, %v444
  %v449 = vrot.slane %v448, 4
  %v450 = vadd.f32 %v448, %v449
  %v451 = vrot.slane %v450, 2
  %v452 = vadd.f32 %v450, %v451
  %v453 = vrot.slane %v452, 1
  %v454 = vadd.f32 %v452, %v453
  %v455 = vadd.f32 %v439, %v441
  %v456 = vadd.f32 %v455, %v443
  %v457 = vadd.f32 %v456, %v445
  %v458 = vrot.slane %v457, 4
  %v459 = vadd.f32 %v457, %v458
  %v460 = vrot.slane %v459, 2
  %v461 = vadd.f32 %v459, %v460
  %v462 = vrot.slane %v461, 1
  %v463 = vadd.f32 %v461, %v462
  %vm464 = vcmask 1040384
  %v465 = vsel %vm464, %v428, %v454
  %v466 = vsel %vm464, %v437, %v463
  %467 = vmatprep.subr.mxu0 %v45
  %468 = vmatpush1.msra.mxu0 %v44
  %469 = vmatprep.subr.mxu0 %v47
  %470 = vmatpush1.msra.mxu0 %v46
  %471 = vmatprep.subr.mxu0 %v49
  %472 = vmatpush1.msra.mxu0 %v48
  %473 = vmatprep.subr.mxu0 %v51
  %474 = vmatpush1.msra.mxu0 %v50
  %475 = vmatprep.subr.mxu0 %v53
  %476 = vmatpush1.msra.mxu0 %v52
  %477 = vmatprep.subr.mxu0 %v55
  %478 = vmatpush1.msra.mxu0 %v54
  %479 = vmatprep.subr.mxu0 %v57
  %480 = vmatpush1.msra.mxu0 %v56
  %481 = vmatprep.subr.mxu0 %v59
  %482 = vmatpush1.msra.mxu0 %v58
  %483 = vmatprep.subr.mxu0 %v61
  %484 = vmatpush1.msra.mxu0 %v60
  %485 = vmatprep.subr.mxu0 %v63
  %486 = vmatpush1.msra.mxu0 %v62
  %487 = vmatprep.subr.mxu0 %v65
  %488 = vmatpush1.msra.mxu0 %v64
  %489 = vmatprep.subr.mxu0 %v67
  %490 = vmatpush1.msra.mxu0 %v66
  %491 = vmatprep.subr.mxu0 %v69
  %492 = vmatpush1.msra.mxu0 %v68
  %493 = vmatprep.subr.mxu0 %v71
  %494 = vmatpush1.msra.mxu0 %v70
  %495 = vmatprep.subr.mxu0 %v73
  %496 = vmatpush1.msra.mxu0 %v72
  %497 = vmatprep.subr.mxu0 %v75
  %498 = vmatpush1.msra.mxu0 %v74
  %499 = vmatprep.subr.mxu0 %v77
  %500 = vmatpush1.msra.mxu0 %v76
  %501 = vmatprep.subr.mxu0 %v79
  %502 = vmatpush1.msra.mxu0 %v78
  %503 = vmatprep.subr.mxu0 %v81
  %504 = vmatpush1.msra.mxu0 %v80
  %505 = vmatprep.subr.mxu0 %v83
  %506 = vmatpush1.msra.mxu0 %v82
  %507 = vmatprep.subr.mxu0 %v85
  %508 = vmatpush1.msra.mxu0 %v84
  %509 = vmatprep.subr.mxu0 %v87
  %510 = vmatpush1.msra.mxu0 %v86
  %511 = vmatprep.subr.mxu0 %v89
  %512 = vmatpush1.msra.mxu0 %v88
  %513 = vmatprep.subr.mxu0 %v91
  %514 = vmatpush1.msra.mxu0 %v90
  %515 = vmatprep.subr.mxu0 %v93
  %516 = vmatpush1.msra.mxu0 %v92
  %517 = vmatprep.subr.mxu0 %v95
  %518 = vmatpush1.msra.mxu0 %v94
  %519 = vmatprep.subr.mxu0 %v97
  %520 = vmatpush1.msra.mxu0 %v96
  %521 = vmatprep.subr.mxu0 %v99
  %522 = vmatpush1.msra.mxu0 %v98
  %523 = vmatprep.subr.mxu0 %v101
  %524 = vmatpush1.msra.mxu0 %v100
  %525 = vmatprep.subr.mxu0 %v103
  %526 = vmatpush1.msra.mxu0 %v102
  %527 = vmatprep.subr.mxu0 %v105
  %528 = vmatpush1.msra.mxu0 %v104
  %529 = vmatprep.subr.mxu0 %v107
  %530 = vmatpush1.msra.mxu0 %v106
  %531 = vmatprep.mubr.f32.mxu0 %v466
  %532 = vmatmul.mubr.f32.gmra.mrb[0].mxu0 %v465
  %v533 = vpop.f32.mrb[0].mxu0
  %v534 = vadd.f32 0.0, %v533
  %v535 = vpop.f32.mrb[0].mxu0
  %v536 = vadd.f32 0.0, %v535
  %537 = vdwg.mxu0
  %v538 = vmul.f32 %v534, %v534
  %v539 = vmul.f32 %v536, %v536
  %v542 = vrot.slane %v538, 7
  %v543 = vrot.slane %v539, 7
  %v546 = vsub.f32 %v534, %v542
  %v547 = vsub.f32 %v536, %v543
  %v548 = vadd.f32 %v546, 1e-05
  %v549 = vadd.f32 %v547, 1e-05
  %v550 = vrsqrt.pop %v548
  %v551 = vrsqrt.pop %v549
  %v554 = vcombine.low %v550, %v551
  %v556 = vunpack.c.l.s4 1966171168
  %v557 = vunpack.c.0.s8 %v556
  %v558 = vlaneseq
  %v559 = vshrl.u32 %v558, 7
  %v560 = vsub.s32 %v557, %v559
  %v561 = vrot.slane %v554, %v560
  %v562 = vcombine.high %v561, %v561
  %v564 = vunpack.c.l.s4 1966171168
  %v565 = vunpack.c.0.s8 %v564
  %v566 = vlaneseq
  %v567 = vshrl.u32 %v566, 7
  %v568 = vsub.s32 %v565, %v567
  %v569 = vrot.slane %v562, %v568
  %v571 = vmul.f32 %v418, %v569
  %v572 = vlaneseq
  %v573 = vshrl.u32 %v572, 7
  %v574 = vsub.s32 0, %v573
  %v575 = vrot.slane %v534, %v574
  %v576 = vlaneseq
  %v577 = vshrl.u32 %v576, 7
  %v578 = vsub.s32 0, %v577
  %v579 = vrot.slane %v536, %v578
  %v580 = vsub.f32 %v400, %v575
  %v581 = vsub.f32 %v402, %v579
  %v582 = vsub.f32 %v404, %v575
  %v583 = vsub.f32 %v406, %v579
  %v584 = vsub.f32 %v410, %v575
  %v585 = vsub.f32 %v412, %v579
  %v586 = vsub.f32 %v414, %v575
  %v587 = vsub.f32 %v416, %v579
  %v589 = vlaneseq
  %v590 = vshrl.u32 %v589, 7
  %v591 = vsub.s32 0, %v590
  %v592 = vrot.slane %v571, %v591
  %v593 = vlaneseq
  %v594 = vshrl.u32 %v593, 7
  %v595 = vsub.s32 1, %v594
  %v596 = vrot.slane %v571, %v595
  %v599 = vmul.f32 %v580, %v592
  %v600 = vmul.f32 %v581, %v596
  %v601 = vmul.f32 %v582, %v592
  %v602 = vmul.f32 %v583, %v596
  %v603 = vmul.f32 %v584, %v592
  %v604 = vmul.f32 %v585, %v596
  %v605 = vmul.f32 %v586, %v592
  %v606 = vmul.f32 %v587, %v596
  %v608 = vlaneseq
  %v609 = vshrl.u32 %v608, 7
  %v610 = vsub.s32 0, %v609
  %v611 = vrot.slane %v419, %v610
  %v612 = vlaneseq
  %v613 = vshrl.u32 %v612, 7
  %v614 = vsub.s32 1, %v613
  %v615 = vrot.slane %v419, %v614
  %v618 = vadd.f32 %v599, %v611
  %v619 = vadd.f32 %v600, %v615
  %v620 = vadd.f32 %v601, %v611
  %v621 = vadd.f32 %v602, %v615
  %v622 = vadd.f32 %v603, %v611
  %v623 = vadd.f32 %v604, %v615
  %v624 = vadd.f32 %v605, %v611
  %v625 = vadd.f32 %v606, %v615
  %v626 = vmax.f32 %v618, 0.0
  %v627 = vmax.f32 %v619, 0.0
  %v628 = vmax.f32 %v620, 0.0
  %v629 = vmax.f32 %v621, 0.0
  %v630 = vmax.f32 %v622, 0.0
  %v631 = vmax.f32 %v623, 0.0
  %v632 = vmax.f32 %v624, 0.0
  %v633 = vmax.f32 %v625, 0.0
  %vm634 = vcmp.ne.s32.totalorder %v157, 0
  %vm635 = vcmp.ne.s32.totalorder %v158, 0
  %vm636 = vcmp.ne.s32.totalorder %v159, 0
  %vm637 = vcmp.ne.s32.totalorder %v160, 0
  %v638 = vrot.slane %v626, 7
  %v639 = vrot.slane %v627, 7
  %v640 = vrot.slane %v628, 7
  %v641 = vrot.slane %v629, 7
  %v642 = vrot.slane %v630, 7
  %v643 = vrot.slane %v631, 7
  %v644 = vrot.slane %v632, 7
  %v645 = vrot.slane %v633, 7
  %vm646 = vcmp.lt.s32.totalorder %v109, 1
  %v647 = vsel %vm646, %v642, %v644
  %v648 = vsel %vm646, %v643, %v645
  %v649 = vsel %vm646, %v640, %v642
  %v650 = vsel %vm646, %v641, %v643
  %v651 = vsel %vm646, %v638, %v640
  %v652 = vsel %vm646, %v639, %v641
  %v653 = vsel %vm646, %v644, %v638
  %v654 = vsel %vm646, %v645, %v639
  %v655 = vsel %vm634, %v653, 0.0
  %v656 = vsel %vm634, %v654, 0.0
  %v657 = vsel %vm635, %v651, 0.0
  %v658 = vsel %vm635, %v652, 0.0
  %v659 = vsel %vm636, %v649, 0.0
  %v660 = vsel %vm636, %v650, 0.0
  %v661 = vsel %vm637, %v647, 0.0
  %v662 = vsel %vm637, %v648, 0.0
  %v663 = vpack.c.bf16 %v657, %v655
  %v664 = vpack.c.bf16 %v658, %v656
  %v665 = vpack.c.bf16 %v661, %v659
  %v666 = vpack.c.bf16 %v662, %v660
  %vm667 = vcmp.ne.s32.totalorder %v157, 15
  %vm668 = vcmp.ne.s32.totalorder %v158, 15
  %vm669 = vcmp.ne.s32.totalorder %v159, 15
  %vm670 = vcmp.ne.s32.totalorder %v160, 15
  %v671 = vrot.slane %v626, 1
  %v672 = vrot.slane %v627, 1
  %v673 = vrot.slane %v628, 1
  %v674 = vrot.slane %v629, 1
  %v675 = vrot.slane %v630, 1
  %v676 = vrot.slane %v631, 1
  %v677 = vrot.slane %v632, 1
  %v678 = vrot.slane %v633, 1
  %vm679 = vcmp.lt.s32.totalorder %v109, 7
  %v680 = vsel %vm679, %v675, %v677
  %v681 = vsel %vm679, %v676, %v678
  %v682 = vsel %vm679, %v673, %v675
  %v683 = vsel %vm679, %v674, %v676
  %v684 = vsel %vm679, %v671, %v673
  %v685 = vsel %vm679, %v672, %v674
  %v686 = vsel %vm679, %v677, %v671
  %v687 = vsel %vm679, %v678, %v672
  %v688 = vsel %vm667, %v684, 0.0
  %v689 = vsel %vm667, %v685, 0.0
  %v690 = vsel %vm668, %v682, 0.0
  %v691 = vsel %vm668, %v683, 0.0
  %v692 = vsel %vm669, %v680, 0.0
  %v693 = vsel %vm669, %v681, 0.0
  %v694 = vsel %vm670, %v686, 0.0
  %v695 = vsel %vm670, %v687, 0.0
  %v696 = vpack.c.bf16 %v690, %v688
  %v697 = vpack.c.bf16 %v691, %v689
  %v698 = vpack.c.bf16 %v694, %v692
  %v699 = vpack.c.bf16 %v695, %v693
  %v700 = vpack.c.bf16 %v628, %v626
  %v701 = vpack.c.bf16 %v629, %v627
  %v702 = vpack.c.bf16 %v632, %v630
  %v703 = vpack.c.bf16 %v633, %v631
  %v704 = vld [vmem:[%s2] sm:$0xff]
  %v705 = vld [vmem:[%s2 + $0x8] sm:$0xff]
  %v706 = vld [vmem:[%s2 + $0x10] sm:$0xff]
  %v707 = vld [vmem:[%s2 + $0x18] sm:$0xff]
  %v708 = vld [vmem:[%s2 + $0x20] sm:$0xff]
  %v709 = vld [vmem:[%s2 + $0x28] sm:$0xff]
  %v710 = vld [vmem:[%s2 + $0x30] sm:$0xff]
  %v711 = vld [vmem:[%s2 + $0x38] sm:$0xff]
  %v712 = vld [vmem:[%s2 + $0x40] sm:$0xff]
  %v713 = vld [vmem:[%s2 + $0x48] sm:$0xff]
  %v714 = vld [vmem:[%s2 + $0x50] sm:$0xff]
  %v715 = vld [vmem:[%s2 + $0x58] sm:$0xff]
  %v716 = vld [vmem:[%s2 + $0x60] sm:$0xff]
  %v717 = vld [vmem:[%s2 + $0x68] sm:$0xff]
  %v718 = vld [vmem:[%s2 + $0x70] sm:$0xff]
  %v719 = vld [vmem:[%s2 + $0x78] sm:$0xff]
  %v720 = vld [vmem:[%s2 + $0x80] sm:$0xff]
  %v721 = vld [vmem:[%s2 + $0x88] sm:$0xff]
  %v722 = vld [vmem:[%s2 + $0x90] sm:$0xff]
  %v723 = vld [vmem:[%s2 + $0x98] sm:$0xff]
  %v724 = vld [vmem:[%s2 + $0xa0] sm:$0xff]
  %v725 = vld [vmem:[%s2 + $0xa8] sm:$0xff]
  %v726 = vld [vmem:[%s2 + $0xb0] sm:$0xff]
  %v727 = vld [vmem:[%s2 + $0xb8] sm:$0xff]
  %v728 = vld [vmem:[%s2 + $0xc0] sm:$0xff]
  %v729 = vld [vmem:[%s2 + $0xc8] sm:$0xff]
  %v730 = vld [vmem:[%s2 + $0xd0] sm:$0xff]
  %v731 = vld [vmem:[%s2 + $0xd8] sm:$0xff]
  %v732 = vld [vmem:[%s2 + $0xe0] sm:$0xff]
  %v733 = vld [vmem:[%s2 + $0xe8] sm:$0xff]
  %v734 = vld [vmem:[%s2 + $0xf0] sm:$0xff]
  %v735 = vld [vmem:[%s2 + $0xf8] sm:$0xff]
  %v736 = vld [vmem:[%s3] sm:$0xff]
  %v737 = vld [vmem:[%s3 + $0x8] sm:$0xff]
  %v738 = vld [vmem:[%s3 + $0x10] sm:$0xff]
  %v739 = vld [vmem:[%s3 + $0x18] sm:$0xff]
  %v740 = vld [vmem:[%s3 + $0x20] sm:$0xff]
  %v741 = vld [vmem:[%s3 + $0x28] sm:$0xff]
  %v742 = vld [vmem:[%s3 + $0x30] sm:$0xff]
  %v743 = vld [vmem:[%s3 + $0x38] sm:$0xff]
  %v744 = vld [vmem:[%s3 + $0x40] sm:$0xff]
  %v745 = vld [vmem:[%s3 + $0x48] sm:$0xff]
  %v746 = vld [vmem:[%s3 + $0x50] sm:$0xff]
  %v747 = vld [vmem:[%s3 + $0x58] sm:$0xff]
  %v748 = vld [vmem:[%s3 + $0x60] sm:$0xff]
  %v749 = vld [vmem:[%s3 + $0x68] sm:$0xff]
  %v750 = vld [vmem:[%s3 + $0x70] sm:$0xff]
  %v751 = vld [vmem:[%s3 + $0x78] sm:$0xff]
  %v752 = vld [vmem:[%s3 + $0x80] sm:$0xff]
  %v753 = vld [vmem:[%s3 + $0x88] sm:$0xff]
  %v754 = vld [vmem:[%s3 + $0x90] sm:$0xff]
  %v755 = vld [vmem:[%s3 + $0x98] sm:$0xff]
  %v756 = vld [vmem:[%s3 + $0xa0] sm:$0xff]
  %v757 = vld [vmem:[%s3 + $0xa8] sm:$0xff]
  %v758 = vld [vmem:[%s3 + $0xb0] sm:$0xff]
  %v759 = vld [vmem:[%s3 + $0xb8] sm:$0xff]
  %v760 = vld [vmem:[%s3 + $0xc0] sm:$0xff]
  %v761 = vld [vmem:[%s3 + $0xc8] sm:$0xff]
  %v762 = vld [vmem:[%s3 + $0xd0] sm:$0xff]
  %v763 = vld [vmem:[%s3 + $0xd8] sm:$0xff]
  %v764 = vld [vmem:[%s3 + $0xe0] sm:$0xff]
  %v765 = vld [vmem:[%s3 + $0xe8] sm:$0xff]
  %v766 = vld [vmem:[%s3 + $0xf0] sm:$0xff]
  %v767 = vld [vmem:[%s3 + $0xf8] sm:$0xff]
  %v800 = vunpack.c.l.b16 %v736
  %v801 = vunpack.c.h.b16 %v736
  %v802 = vunpack.c.l.b16 %v737
  %v803 = vunpack.c.h.b16 %v737
  %v804 = vunpack.c.l.b16 %v738
  %v805 = vunpack.c.h.b16 %v738
  %v806 = vunpack.c.l.b16 %v739
  %v807 = vunpack.c.h.b16 %v739
  %v808 = vunpack.c.l.b16 %v740
  %v809 = vunpack.c.h.b16 %v740
  %v810 = vunpack.c.l.b16 %v741
  %v811 = vunpack.c.h.b16 %v741
  %v812 = vunpack.c.l.b16 %v742
  %v813 = vunpack.c.h.b16 %v742
  %v814 = vunpack.c.l.b16 %v743
  %v815 = vunpack.c.h.b16 %v743
  %v816 = vunpack.c.l.b16 %v744
  %v817 = vunpack.c.h.b16 %v744
  %v818 = vunpack.c.l.b16 %v745
  %v819 = vunpack.c.h.b16 %v745
  %v820 = vunpack.c.l.b16 %v746
  %v821 = vunpack.c.h.b16 %v746
  %v822 = vunpack.c.l.b16 %v747
  %v823 = vunpack.c.h.b16 %v747
  %v824 = vunpack.c.l.b16 %v748
  %v825 = vunpack.c.h.b16 %v748
  %v826 = vunpack.c.l.b16 %v749
  %v827 = vunpack.c.h.b16 %v749
  %v828 = vunpack.c.l.b16 %v750
  %v829 = vunpack.c.h.b16 %v750
  %v830 = vunpack.c.l.b16 %v751
  %v831 = vunpack.c.h.b16 %v751
  %v832 = vunpack.c.l.b16 %v752
  %v833 = vunpack.c.h.b16 %v752
  %v834 = vunpack.c.l.b16 %v753
  %v835 = vunpack.c.h.b16 %v753
  %v836 = vunpack.c.l.b16 %v754
  %v837 = vunpack.c.h.b16 %v754
  %v838 = vunpack.c.l.b16 %v755
  %v839 = vunpack.c.h.b16 %v755
  %v840 = vunpack.c.l.b16 %v756
  %v841 = vunpack.c.h.b16 %v756
  %v842 = vunpack.c.l.b16 %v757
  %v843 = vunpack.c.h.b16 %v757
  %v844 = vunpack.c.l.b16 %v758
  %v845 = vunpack.c.h.b16 %v758
  %v846 = vunpack.c.l.b16 %v759
  %v847 = vunpack.c.h.b16 %v759
  %v848 = vunpack.c.l.b16 %v760
  %v849 = vunpack.c.h.b16 %v760
  %v850 = vunpack.c.l.b16 %v761
  %v851 = vunpack.c.h.b16 %v761
  %v852 = vunpack.c.l.b16 %v762
  %v853 = vunpack.c.h.b16 %v762
  %v854 = vunpack.c.l.b16 %v763
  %v855 = vunpack.c.h.b16 %v763
  %v856 = vunpack.c.l.b16 %v764
  %v857 = vunpack.c.h.b16 %v764
  %v858 = vunpack.c.l.b16 %v765
  %v859 = vunpack.c.h.b16 %v765
  %v860 = vunpack.c.l.b16 %v766
  %v861 = vunpack.c.h.b16 %v766
  %v862 = vunpack.c.l.b16 %v767
  %v863 = vunpack.c.h.b16 %v767
  %v864 = vpack.c.b16 %v802, %v800
  %v865 = vpack.c.b16 %v803, %v801
  %v866 = vpack.c.b16 %v806, %v804
  %v867 = vpack.c.b16 %v807, %v805
  %v868 = vpack.c.b16 %v810, %v808
  %v869 = vpack.c.b16 %v811, %v809
  %v870 = vpack.c.b16 %v814, %v812
  %v871 = vpack.c.b16 %v815, %v813
  %v872 = vpack.c.b16 %v818, %v816
  %v873 = vpack.c.b16 %v819, %v817
  %v874 = vpack.c.b16 %v822, %v820
  %v875 = vpack.c.b16 %v823, %v821
  %v876 = vpack.c.b16 %v826, %v824
  %v877 = vpack.c.b16 %v827, %v825
  %v878 = vpack.c.b16 %v830, %v828
  %v879 = vpack.c.b16 %v831, %v829
  %v880 = vpack.c.b16 %v834, %v832
  %v881 = vpack.c.b16 %v835, %v833
  %v882 = vpack.c.b16 %v838, %v836
  %v883 = vpack.c.b16 %v839, %v837
  %v884 = vpack.c.b16 %v842, %v840
  %v885 = vpack.c.b16 %v843, %v841
  %v886 = vpack.c.b16 %v846, %v844
  %v887 = vpack.c.b16 %v847, %v845
  %v888 = vpack.c.b16 %v850, %v848
  %v889 = vpack.c.b16 %v851, %v849
  %v890 = vpack.c.b16 %v854, %v852
  %v891 = vpack.c.b16 %v855, %v853
  %v892 = vpack.c.b16 %v858, %v856
  %v893 = vpack.c.b16 %v859, %v857
  %v894 = vpack.c.b16 %v862, %v860
  %v895 = vpack.c.b16 %v863, %v861
  %928 = vmatprep.subr.bf16.mxu0 %v865
  %929 = vmatpush1.bf16.msra.mxu0 %v864
  %930 = vmatprep.subr.bf16.mxu0 %v867
  %931 = vmatpush1.bf16.msra.mxu0 %v866
  %932 = vmatprep.subr.bf16.mxu0 %v869
  %933 = vmatpush1.bf16.msra.mxu0 %v868
  %934 = vmatprep.subr.bf16.mxu0 %v871
  %935 = vmatpush1.bf16.msra.mxu0 %v870
  %936 = vmatprep.subr.bf16.mxu0 %v873
  %937 = vmatpush1.bf16.msra.mxu0 %v872
  %938 = vmatprep.subr.bf16.mxu0 %v875
  %939 = vmatpush1.bf16.msra.mxu0 %v874
  %940 = vmatprep.subr.bf16.mxu0 %v877
  %941 = vmatpush1.bf16.msra.mxu0 %v876
  %942 = vmatprep.subr.bf16.mxu0 %v879
  %943 = vmatpush1.bf16.msra.mxu0 %v878
  %944 = vmatprep.subr.bf16.mxu0 %v881
  %945 = vmatpush1.bf16.msra.mxu0 %v880
  %946 = vmatprep.subr.bf16.mxu0 %v883
  %947 = vmatpush1.bf16.msra.mxu0 %v882
  %948 = vmatprep.subr.bf16.mxu0 %v885
  %949 = vmatpush1.bf16.msra.mxu0 %v884
  %950 = vmatprep.subr.bf16.mxu0 %v887
  %951 = vmatpush1.bf16.msra.mxu0 %v886
  %952 = vmatprep.subr.bf16.mxu0 %v889
  %953 = vmatpush1.bf16.msra.mxu0 %v888
  %954 = vmatprep.subr.bf16.mxu0 %v891
  %955 = vmatpush1.bf16.msra.mxu0 %v890
  %956 = vmatprep.subr.bf16.mxu0 %v893
  %957 = vmatpush1.bf16.msra.mxu0 %v892
  %958 = vmatprep.subr.bf16.mxu0 %v895
  %959 = vmatpush1.bf16.msra.mxu0 %v894
  %960 = vmatprep.mubr.bf16.mxu0 %v701
  %961 = vmatmul.mubr.bf16.gmra.mrb[0].mxu0 %v700
  %v962 = vpop.f32.mrb[0].mxu0
  %v963 = vadd.f32 0.0, %v962
  %v964 = vpop.f32.mrb[0].mxu0
  %v965 = vadd.f32 0.0, %v964
  %v966 = vpop.f32.mrb[0].mxu0
  %v967 = vadd.f32 0.0, %v966
  %v968 = vpop.f32.mrb[0].mxu0
  %v969 = vadd.f32 0.0, %v968
  %970 = vmatprep.mubr.bf16.mxu0 %v703
  %971 = vmatmul.mubr.bf16.gmra.mrb[0].mxu0 %v702
  %v972 = vpop.f32.mrb[0].mxu0
  %v973 = vadd.f32 0.0, %v972
  %v974 = vpop.f32.mrb[0].mxu0
  %v975 = vadd.f32 0.0, %v974
  %v976 = vpop.f32.mrb[0].mxu0
  %v977 = vadd.f32 0.0, %v976
  %v978 = vpop.f32.mrb[0].mxu0
  %v979 = vadd.f32 0.0, %v978
  %980 = vdwg.mxu0
  %v1013 = vunpack.c.l.b16 %v704
  %v1014 = vunpack.c.h.b16 %v704
  %v1015 = vunpack.c.l.b16 %v705
  %v1016 = vunpack.c.h.b16 %v705
  %v1017 = vunpack.c.l.b16 %v706
  %v1018 = vunpack.c.h.b16 %v706
  %v1019 = vunpack.c.l.b16 %v707
  %v1020 = vunpack.c.h.b16 %v707
  %v1021 = vunpack.c.l.b16 %v708
  %v1022 = vunpack.c.h.b16 %v708
  %v1023 = vunpack.c.l.b16 %v709
  %v1024 = vunpack.c.h.b16 %v709
  %v1025 = vunpack.c.l.b16 %v710
  %v1026 = vunpack.c.h.b16 %v710
  %v1027 = vunpack.c.l.b16 %v711
  %v1028 = vunpack.c.h.b16 %v711
  %v1029 = vunpack.c.l.b16 %v712
  %v1030 = vunpack.c.h.b16 %v712
  %v1031 = vunpack.c.l.b16 %v713
  %v1032 = vunpack.c.h.b16 %v713
  %v1033 = vunpack.c.l.b16 %v714
  %v1034 = vunpack.c.h.b16 %v714
  %v1035 = vunpack.c.l.b16 %v715
  %v1036 = vunpack.c.h.b16 %v715
  %v1037 = vunpack.c.l.b16 %v716
  %v1038 = vunpack.c.h.b16 %v716
  %v1039 = vunpack.c.l.b16 %v717
  %v1040 = vunpack.c.h.b16 %v717
  %v1041 = vunpack.c.l.b16 %v718
  %v1042 = vunpack.c.h.b16 %v718
  %v1043 = vunpack.c.l.b16 %v719
  %v1044 = vunpack.c.h.b16 %v719
  %v1045 = vunpack.c.l.b16 %v720
  %v1046 = vunpack.c.h.b16 %v720
  %v1047 = vunpack.c.l.b16 %v721
  %v1048 = vunpack.c.h.b16 %v721
  %v1049 = vunpack.c.l.b16 %v722
  %v1050 = vunpack.c.h.b16 %v722
  %v1051 = vunpack.c.l.b16 %v723
  %v1052 = vunpack.c.h.b16 %v723
  %v1053 = vunpack.c.l.b16 %v724
  %v1054 = vunpack.c.h.b16 %v724
  %v1055 = vunpack.c.l.b16 %v725
  %v1056 = vunpack.c.h.b16 %v725
  %v1057 = vunpack.c.l.b16 %v726
  %v1058 = vunpack.c.h.b16 %v726
  %v1059 = vunpack.c.l.b16 %v727
  %v1060 = vunpack.c.h.b16 %v727
  %v1061 = vunpack.c.l.b16 %v728
  %v1062 = vunpack.c.h.b16 %v728
  %v1063 = vunpack.c.l.b16 %v729
  %v1064 = vunpack.c.h.b16 %v729
  %v1065 = vunpack.c.l.b16 %v730
  %v1066 = vunpack.c.h.b16 %v730
  %v1067 = vunpack.c.l.b16 %v731
  %v1068 = vunpack.c.h.b16 %v731
  %v1069 = vunpack.c.l.b16 %v732
  %v1070 = vunpack.c.h.b16 %v732
  %v1071 = vunpack.c.l.b16 %v733
  %v1072 = vunpack.c.h.b16 %v733
  %v1073 = vunpack.c.l.b16 %v734
  %v1074 = vunpack.c.h.b16 %v734
  %v1075 = vunpack.c.l.b16 %v735
  %v1076 = vunpack.c.h.b16 %v735
  %v1077 = vpack.c.b16 %v1015, %v1013
  %v1078 = vpack.c.b16 %v1016, %v1014
  %v1079 = vpack.c.b16 %v1019, %v1017
  %v1080 = vpack.c.b16 %v1020, %v1018
  %v1081 = vpack.c.b16 %v1023, %v1021
  %v1082 = vpack.c.b16 %v1024, %v1022
  %v1083 = vpack.c.b16 %v1027, %v1025
  %v1084 = vpack.c.b16 %v1028, %v1026
  %v1085 = vpack.c.b16 %v1031, %v1029
  %v1086 = vpack.c.b16 %v1032, %v1030
  %v1087 = vpack.c.b16 %v1035, %v1033
  %v1088 = vpack.c.b16 %v1036, %v1034
  %v1089 = vpack.c.b16 %v1039, %v1037
  %v1090 = vpack.c.b16 %v1040, %v1038
  %v1091 = vpack.c.b16 %v1043, %v1041
  %v1092 = vpack.c.b16 %v1044, %v1042
  %v1093 = vpack.c.b16 %v1047, %v1045
  %v1094 = vpack.c.b16 %v1048, %v1046
  %v1095 = vpack.c.b16 %v1051, %v1049
  %v1096 = vpack.c.b16 %v1052, %v1050
  %v1097 = vpack.c.b16 %v1055, %v1053
  %v1098 = vpack.c.b16 %v1056, %v1054
  %v1099 = vpack.c.b16 %v1059, %v1057
  %v1100 = vpack.c.b16 %v1060, %v1058
  %v1101 = vpack.c.b16 %v1063, %v1061
  %v1102 = vpack.c.b16 %v1064, %v1062
  %v1103 = vpack.c.b16 %v1067, %v1065
  %v1104 = vpack.c.b16 %v1068, %v1066
  %v1105 = vpack.c.b16 %v1071, %v1069
  %v1106 = vpack.c.b16 %v1072, %v1070
  %v1107 = vpack.c.b16 %v1075, %v1073
  %v1108 = vpack.c.b16 %v1076, %v1074
  %1141 = vmatprep.subr.bf16.mxu0 %v1078
  %1142 = vmatpush1.bf16.msra.mxu0 %v1077
  %1143 = vmatprep.subr.bf16.mxu0 %v1080
  %1144 = vmatpush1.bf16.msra.mxu0 %v1079
  %1145 = vmatprep.subr.bf16.mxu0 %v1082
  %1146 = vmatpush1.bf16.msra.mxu0 %v1081
  %1147 = vmatprep.subr.bf16.mxu0 %v1084
  %1148 = vmatpush1.bf16.msra.mxu0 %v1083
  %1149 = vmatprep.subr.bf16.mxu0 %v1086
  %1150 = vmatpush1.bf16.msra.mxu0 %v1085
  %1151 = vmatprep.subr.bf16.mxu0 %v1088
  %1152 = vmatpush1.bf16.msra.mxu0 %v1087
  %1153 = vmatprep.subr.bf16.mxu0 %v1090
  %1154 = vmatpush1.bf16.msra.mxu0 %v1089
  %1155 = vmatprep.subr.bf16.mxu0 %v1092
  %1156 = vmatpush1.bf16.msra.mxu0 %v1091
  %1157 = vmatprep.subr.bf16.mxu0 %v1094
  %1158 = vmatpush1.bf16.msra.mxu0 %v1093
  %1159 = vmatprep.subr.bf16.mxu0 %v1096
  %1160 = vmatpush1.bf16.msra.mxu0 %v1095
  %1161 = vmatprep.subr.bf16.mxu0 %v1098
  %1162 = vmatpush1.bf16.msra.mxu0 %v1097
  %1163 = vmatprep.subr.bf16.mxu0 %v1100
  %1164 = vmatpush1.bf16.msra.mxu0 %v1099
  %1165 = vmatprep.subr.bf16.mxu0 %v1102
  %1166 = vmatpush1.bf16.msra.mxu0 %v1101
  %1167 = vmatprep.subr.bf16.mxu0 %v1104
  %1168 = vmatpush1.bf16.msra.mxu0 %v1103
  %1169 = vmatprep.subr.bf16.mxu0 %v1106
  %1170 = vmatpush1.bf16.msra.mxu0 %v1105
  %1171 = vmatprep.subr.bf16.mxu0 %v1108
  %1172 = vmatpush1.bf16.msra.mxu0 %v1107
  %1173 = vmatprep.mubr.bf16.mxu0 %v664
  %1174 = vmatmul.mubr.bf16.gmra.mrb[0].mxu0 %v663
  %v1175 = vpop.f32.mrb[0].mxu0
  %v1176 = vadd.f32 %v963, %v1175
  %v1177 = vpop.f32.mrb[0].mxu0
  %v1178 = vadd.f32 %v965, %v1177
  %v1179 = vpop.f32.mrb[0].mxu0
  %v1180 = vadd.f32 %v967, %v1179
  %v1181 = vpop.f32.mrb[0].mxu0
  %v1182 = vadd.f32 %v969, %v1181
  %1183 = vmatprep.mubr.bf16.mxu0 %v666
  %1184 = vmatmul.mubr.bf16.gmra.mrb[0].mxu0 %v665
  %v1185 = vpop.f32.mrb[0].mxu0
  %v1186 = vadd.f32 %v973, %v1185
  %v1187 = vpop.f32.mrb[0].mxu0
  %v1188 = vadd.f32 %v975, %v1187
  %v1189 = vpop.f32.mrb[0].mxu0
  %v1190 = vadd.f32 %v977, %v1189
  %v1191 = vpop.f32.mrb[0].mxu0
  %v1192 = vadd.f32 %v979, %v1191
  %1193 = vdwg.mxu0
  %v1194 = vld [vmem:[%s4] sm:$0xff]
  %v1195 = vld [vmem:[%s4 + $0x8] sm:$0xff]
  %v1196 = vld [vmem:[%s4 + $0x10] sm:$0xff]
  %v1197 = vld [vmem:[%s4 + $0x18] sm:$0xff]
  %v1198 = vld [vmem:[%s4 + $0x20] sm:$0xff]
  %v1199 = vld [vmem:[%s4 + $0x28] sm:$0xff]
  %v1200 = vld [vmem:[%s4 + $0x30] sm:$0xff]
  %v1201 = vld [vmem:[%s4 + $0x38] sm:$0xff]
  %v1202 = vld [vmem:[%s4 + $0x40] sm:$0xff]
  %v1203 = vld [vmem:[%s4 + $0x48] sm:$0xff]
  %v1204 = vld [vmem:[%s4 + $0x50] sm:$0xff]
  %v1205 = vld [vmem:[%s4 + $0x58] sm:$0xff]
  %v1206 = vld [vmem:[%s4 + $0x60] sm:$0xff]
  %v1207 = vld [vmem:[%s4 + $0x68] sm:$0xff]
  %v1208 = vld [vmem:[%s4 + $0x70] sm:$0xff]
  %v1209 = vld [vmem:[%s4 + $0x78] sm:$0xff]
  %v1210 = vld [vmem:[%s4 + $0x80] sm:$0xff]
  %v1211 = vld [vmem:[%s4 + $0x88] sm:$0xff]
  %v1212 = vld [vmem:[%s4 + $0x90] sm:$0xff]
  %v1213 = vld [vmem:[%s4 + $0x98] sm:$0xff]
  %v1214 = vld [vmem:[%s4 + $0xa0] sm:$0xff]
  %v1215 = vld [vmem:[%s4 + $0xa8] sm:$0xff]
  %v1216 = vld [vmem:[%s4 + $0xb0] sm:$0xff]
  %v1217 = vld [vmem:[%s4 + $0xb8] sm:$0xff]
  %v1218 = vld [vmem:[%s4 + $0xc0] sm:$0xff]
  %v1219 = vld [vmem:[%s4 + $0xc8] sm:$0xff]
  %v1220 = vld [vmem:[%s4 + $0xd0] sm:$0xff]
  %v1221 = vld [vmem:[%s4 + $0xd8] sm:$0xff]
  %v1222 = vld [vmem:[%s4 + $0xe0] sm:$0xff]
  %v1223 = vld [vmem:[%s4 + $0xe8] sm:$0xff]
  %v1224 = vld [vmem:[%s4 + $0xf0] sm:$0xff]
  %v1225 = vld [vmem:[%s4 + $0xf8] sm:$0xff]
  %v1258 = vunpack.c.l.b16 %v1194
  %v1259 = vunpack.c.h.b16 %v1194
  %v1260 = vunpack.c.l.b16 %v1195
  %v1261 = vunpack.c.h.b16 %v1195
  %v1262 = vunpack.c.l.b16 %v1196
  %v1263 = vunpack.c.h.b16 %v1196
  %v1264 = vunpack.c.l.b16 %v1197
  %v1265 = vunpack.c.h.b16 %v1197
  %v1266 = vunpack.c.l.b16 %v1198
  %v1267 = vunpack.c.h.b16 %v1198
  %v1268 = vunpack.c.l.b16 %v1199
  %v1269 = vunpack.c.h.b16 %v1199
  %v1270 = vunpack.c.l.b16 %v1200
  %v1271 = vunpack.c.h.b16 %v1200
  %v1272 = vunpack.c.l.b16 %v1201
  %v1273 = vunpack.c.h.b16 %v1201
  %v1274 = vunpack.c.l.b16 %v1202
  %v1275 = vunpack.c.h.b16 %v1202
  %v1276 = vunpack.c.l.b16 %v1203
  %v1277 = vunpack.c.h.b16 %v1203
  %v1278 = vunpack.c.l.b16 %v1204
  %v1279 = vunpack.c.h.b16 %v1204
  %v1280 = vunpack.c.l.b16 %v1205
  %v1281 = vunpack.c.h.b16 %v1205
  %v1282 = vunpack.c.l.b16 %v1206
  %v1283 = vunpack.c.h.b16 %v1206
  %v1284 = vunpack.c.l.b16 %v1207
  %v1285 = vunpack.c.h.b16 %v1207
  %v1286 = vunpack.c.l.b16 %v1208
  %v1287 = vunpack.c.h.b16 %v1208
  %v1288 = vunpack.c.l.b16 %v1209
  %v1289 = vunpack.c.h.b16 %v1209
  %v1290 = vunpack.c.l.b16 %v1210
  %v1291 = vunpack.c.h.b16 %v1210
  %v1292 = vunpack.c.l.b16 %v1211
  %v1293 = vunpack.c.h.b16 %v1211
  %v1294 = vunpack.c.l.b16 %v1212
  %v1295 = vunpack.c.h.b16 %v1212
  %v1296 = vunpack.c.l.b16 %v1213
  %v1297 = vunpack.c.h.b16 %v1213
  %v1298 = vunpack.c.l.b16 %v1214
  %v1299 = vunpack.c.h.b16 %v1214
  %v1300 = vunpack.c.l.b16 %v1215
  %v1301 = vunpack.c.h.b16 %v1215
  %v1302 = vunpack.c.l.b16 %v1216
  %v1303 = vunpack.c.h.b16 %v1216
  %v1304 = vunpack.c.l.b16 %v1217
  %v1305 = vunpack.c.h.b16 %v1217
  %v1306 = vunpack.c.l.b16 %v1218
  %v1307 = vunpack.c.h.b16 %v1218
  %v1308 = vunpack.c.l.b16 %v1219
  %v1309 = vunpack.c.h.b16 %v1219
  %v1310 = vunpack.c.l.b16 %v1220
  %v1311 = vunpack.c.h.b16 %v1220
  %v1312 = vunpack.c.l.b16 %v1221
  %v1313 = vunpack.c.h.b16 %v1221
  %v1314 = vunpack.c.l.b16 %v1222
  %v1315 = vunpack.c.h.b16 %v1222
  %v1316 = vunpack.c.l.b16 %v1223
  %v1317 = vunpack.c.h.b16 %v1223
  %v1318 = vunpack.c.l.b16 %v1224
  %v1319 = vunpack.c.h.b16 %v1224
  %v1320 = vunpack.c.l.b16 %v1225
  %v1321 = vunpack.c.h.b16 %v1225
  %v1322 = vpack.c.b16 %v1260, %v1258
  %v1323 = vpack.c.b16 %v1261, %v1259
  %v1324 = vpack.c.b16 %v1264, %v1262
  %v1325 = vpack.c.b16 %v1265, %v1263
  %v1326 = vpack.c.b16 %v1268, %v1266
  %v1327 = vpack.c.b16 %v1269, %v1267
  %v1328 = vpack.c.b16 %v1272, %v1270
  %v1329 = vpack.c.b16 %v1273, %v1271
  %v1330 = vpack.c.b16 %v1276, %v1274
  %v1331 = vpack.c.b16 %v1277, %v1275
  %v1332 = vpack.c.b16 %v1280, %v1278
  %v1333 = vpack.c.b16 %v1281, %v1279
  %v1334 = vpack.c.b16 %v1284, %v1282
  %v1335 = vpack.c.b16 %v1285, %v1283
  %v1336 = vpack.c.b16 %v1288, %v1286
  %v1337 = vpack.c.b16 %v1289, %v1287
  %v1338 = vpack.c.b16 %v1292, %v1290
  %v1339 = vpack.c.b16 %v1293, %v1291
  %v1340 = vpack.c.b16 %v1296, %v1294
  %v1341 = vpack.c.b16 %v1297, %v1295
  %v1342 = vpack.c.b16 %v1300, %v1298
  %v1343 = vpack.c.b16 %v1301, %v1299
  %v1344 = vpack.c.b16 %v1304, %v1302
  %v1345 = vpack.c.b16 %v1305, %v1303
  %v1346 = vpack.c.b16 %v1308, %v1306
  %v1347 = vpack.c.b16 %v1309, %v1307
  %v1348 = vpack.c.b16 %v1312, %v1310
  %v1349 = vpack.c.b16 %v1313, %v1311
  %v1350 = vpack.c.b16 %v1316, %v1314
  %v1351 = vpack.c.b16 %v1317, %v1315
  %v1352 = vpack.c.b16 %v1320, %v1318
  %v1353 = vpack.c.b16 %v1321, %v1319
  %1386 = vmatprep.subr.bf16.mxu0 %v1323
  %1387 = vmatpush1.bf16.msra.mxu0 %v1322
  %1388 = vmatprep.subr.bf16.mxu0 %v1325
  %1389 = vmatpush1.bf16.msra.mxu0 %v1324
  %1390 = vmatprep.subr.bf16.mxu0 %v1327
  %1391 = vmatpush1.bf16.msra.mxu0 %v1326
  %1392 = vmatprep.subr.bf16.mxu0 %v1329
  %1393 = vmatpush1.bf16.msra.mxu0 %v1328
  %1394 = vmatprep.subr.bf16.mxu0 %v1331
  %1395 = vmatpush1.bf16.msra.mxu0 %v1330
  %1396 = vmatprep.subr.bf16.mxu0 %v1333
  %1397 = vmatpush1.bf16.msra.mxu0 %v1332
  %1398 = vmatprep.subr.bf16.mxu0 %v1335
  %1399 = vmatpush1.bf16.msra.mxu0 %v1334
  %1400 = vmatprep.subr.bf16.mxu0 %v1337
  %1401 = vmatpush1.bf16.msra.mxu0 %v1336
  %1402 = vmatprep.subr.bf16.mxu0 %v1339
  %1403 = vmatpush1.bf16.msra.mxu0 %v1338
  %1404 = vmatprep.subr.bf16.mxu0 %v1341
  %1405 = vmatpush1.bf16.msra.mxu0 %v1340
  %1406 = vmatprep.subr.bf16.mxu0 %v1343
  %1407 = vmatpush1.bf16.msra.mxu0 %v1342
  %1408 = vmatprep.subr.bf16.mxu0 %v1345
  %1409 = vmatpush1.bf16.msra.mxu0 %v1344
  %1410 = vmatprep.subr.bf16.mxu0 %v1347
  %1411 = vmatpush1.bf16.msra.mxu0 %v1346
  %1412 = vmatprep.subr.bf16.mxu0 %v1349
  %1413 = vmatpush1.bf16.msra.mxu0 %v1348
  %1414 = vmatprep.subr.bf16.mxu0 %v1351
  %1415 = vmatpush1.bf16.msra.mxu0 %v1350
  %1416 = vmatprep.subr.bf16.mxu0 %v1353
  %1417 = vmatpush1.bf16.msra.mxu0 %v1352
  %1418 = vmatprep.mubr.bf16.mxu0 %v697
  %1419 = vmatmul.mubr.bf16.gmra.mrb[0].mxu0 %v696
  %v1420 = vpop.f32.mrb[0].mxu0
  %v1421 = vadd.f32 0.0, %v1420
  %v1422 = vpop.f32.mrb[0].mxu0
  %v1423 = vadd.f32 0.0, %v1422
  %v1424 = vpop.f32.mrb[0].mxu0
  %v1425 = vadd.f32 0.0, %v1424
  %v1426 = vpop.f32.mrb[0].mxu0
  %v1427 = vadd.f32 0.0, %v1426
  %1428 = vmatprep.mubr.bf16.mxu0 %v699
  %1429 = vmatmul.mubr.bf16.gmra.mrb[0].mxu0 %v698
  %v1430 = vpop.f32.mrb[0].mxu0
  %v1431 = vadd.f32 0.0, %v1430
  %v1432 = vpop.f32.mrb[0].mxu0
  %v1433 = vadd.f32 0.0, %v1432
  %v1434 = vpop.f32.mrb[0].mxu0
  %v1435 = vadd.f32 0.0, %v1434
  %v1436 = vpop.f32.mrb[0].mxu0
  %v1437 = vadd.f32 0.0, %v1436
  %1438 = vdwg.mxu0
  %v1439 = vadd.f32 %v1176, %v1421
  %v1440 = vadd.f32 %v1178, %v1423
  %v1441 = vadd.f32 %v1180, %v1425
  %v1442 = vadd.f32 %v1182, %v1427
  %v1443 = vadd.f32 %v1186, %v1431
  %v1444 = vadd.f32 %v1188, %v1433
  %v1445 = vadd.f32 %v1190, %v1435
  %v1446 = vadd.f32 %v1192, %v1437
  %v1447 = vld [vmem:[%s9] sm:$0x3]
  %v1448 = vld [vmem:[%s10] sm:$0x3]
  %v1449 = vadd.f32 %v1439, %v1441
  %v1450 = vadd.f32 %v1449, %v1443
  %v1451 = vadd.f32 %v1450, %v1445
  %v1452 = vrot.slane %v1451, 4
  %v1453 = vadd.f32 %v1451, %v1452
  %v1454 = vrot.slane %v1453, 2
  %v1455 = vadd.f32 %v1453, %v1454
  %v1456 = vrot.slane %v1455, 1
  %v1457 = vadd.f32 %v1455, %v1456
  %v1458 = vadd.f32 %v1440, %v1442
  %v1459 = vadd.f32 %v1458, %v1444
  %v1460 = vadd.f32 %v1459, %v1446
  %v1461 = vrot.slane %v1460, 4
  %v1462 = vadd.f32 %v1460, %v1461
  %v1463 = vrot.slane %v1462, 2
  %v1464 = vadd.f32 %v1462, %v1463
  %v1465 = vrot.slane %v1464, 1
  %v1466 = vadd.f32 %v1464, %v1465
  %v1467 = vmul.f32 %v1439, %v1439
  %v1468 = vmul.f32 %v1440, %v1440
  %v1469 = vmul.f32 %v1441, %v1441
  %v1470 = vmul.f32 %v1442, %v1442
  %v1471 = vmul.f32 %v1443, %v1443
  %v1472 = vmul.f32 %v1444, %v1444
  %v1473 = vmul.f32 %v1445, %v1445
  %v1474 = vmul.f32 %v1446, %v1446
  %v1475 = vadd.f32 %v1467, %v1469
  %v1476 = vadd.f32 %v1475, %v1471
  %v1477 = vadd.f32 %v1476, %v1473
  %v1478 = vrot.slane %v1477, 4
  %v1479 = vadd.f32 %v1477, %v1478
  %v1480 = vrot.slane %v1479, 2
  %v1481 = vadd.f32 %v1479, %v1480
  %v1482 = vrot.slane %v1481, 1
  %v1483 = vadd.f32 %v1481, %v1482
  %v1484 = vadd.f32 %v1468, %v1470
  %v1485 = vadd.f32 %v1484, %v1472
  %v1486 = vadd.f32 %v1485, %v1474
  %v1487 = vrot.slane %v1486, 4
  %v1488 = vadd.f32 %v1486, %v1487
  %v1489 = vrot.slane %v1488, 2
  %v1490 = vadd.f32 %v1488, %v1489
  %v1491 = vrot.slane %v1490, 1
  %v1492 = vadd.f32 %v1490, %v1491
  %v1493 = vsel %vm464, %v1457, %v1483
  %v1494 = vsel %vm464, %v1466, %v1492
  %1495 = vmatprep.subr.mxu0 %v45
  %1496 = vmatpush1.msra.mxu0 %v44
  %1497 = vmatprep.subr.mxu0 %v47
  %1498 = vmatpush1.msra.mxu0 %v46
  %1499 = vmatprep.subr.mxu0 %v49
  %1500 = vmatpush1.msra.mxu0 %v48
  %1501 = vmatprep.subr.mxu0 %v51
  %1502 = vmatpush1.msra.mxu0 %v50
  %1503 = vmatprep.subr.mxu0 %v53
  %1504 = vmatpush1.msra.mxu0 %v52
  %1505 = vmatprep.subr.mxu0 %v55
  %1506 = vmatpush1.msra.mxu0 %v54
  %1507 = vmatprep.subr.mxu0 %v57
  %1508 = vmatpush1.msra.mxu0 %v56
  %1509 = vmatprep.subr.mxu0 %v59
  %1510 = vmatpush1.msra.mxu0 %v58
  %1511 = vmatprep.subr.mxu0 %v61
  %1512 = vmatpush1.msra.mxu0 %v60
  %1513 = vmatprep.subr.mxu0 %v63
  %1514 = vmatpush1.msra.mxu0 %v62
  %1515 = vmatprep.subr.mxu0 %v65
  %1516 = vmatpush1.msra.mxu0 %v64
  %1517 = vmatprep.subr.mxu0 %v67
  %1518 = vmatpush1.msra.mxu0 %v66
  %1519 = vmatprep.subr.mxu0 %v69
  %1520 = vmatpush1.msra.mxu0 %v68
  %1521 = vmatprep.subr.mxu0 %v71
  %1522 = vmatpush1.msra.mxu0 %v70
  %1523 = vmatprep.subr.mxu0 %v73
  %1524 = vmatpush1.msra.mxu0 %v72
  %1525 = vmatprep.subr.mxu0 %v75
  %1526 = vmatpush1.msra.mxu0 %v74
  %1527 = vmatprep.subr.mxu0 %v77
  %1528 = vmatpush1.msra.mxu0 %v76
  %1529 = vmatprep.subr.mxu0 %v79
  %1530 = vmatpush1.msra.mxu0 %v78
  %1531 = vmatprep.subr.mxu0 %v81
  %1532 = vmatpush1.msra.mxu0 %v80
  %1533 = vmatprep.subr.mxu0 %v83
  %1534 = vmatpush1.msra.mxu0 %v82
  %1535 = vmatprep.subr.mxu0 %v85
  %1536 = vmatpush1.msra.mxu0 %v84
  %1537 = vmatprep.subr.mxu0 %v87
  %1538 = vmatpush1.msra.mxu0 %v86
  %1539 = vmatprep.subr.mxu0 %v89
  %1540 = vmatpush1.msra.mxu0 %v88
  %1541 = vmatprep.subr.mxu0 %v91
  %1542 = vmatpush1.msra.mxu0 %v90
  %1543 = vmatprep.subr.mxu0 %v93
  %1544 = vmatpush1.msra.mxu0 %v92
  %1545 = vmatprep.subr.mxu0 %v95
  %1546 = vmatpush1.msra.mxu0 %v94
  %1547 = vmatprep.subr.mxu0 %v97
  %1548 = vmatpush1.msra.mxu0 %v96
  %1549 = vmatprep.subr.mxu0 %v99
  %1550 = vmatpush1.msra.mxu0 %v98
  %1551 = vmatprep.subr.mxu0 %v101
  %1552 = vmatpush1.msra.mxu0 %v100
  %1553 = vmatprep.subr.mxu0 %v103
  %1554 = vmatpush1.msra.mxu0 %v102
  %1555 = vmatprep.subr.mxu0 %v105
  %1556 = vmatpush1.msra.mxu0 %v104
  %1557 = vmatprep.subr.mxu0 %v107
  %1558 = vmatpush1.msra.mxu0 %v106
  %1559 = vmatprep.mubr.f32.mxu0 %v1494
  %1560 = vmatmul.mubr.f32.gmra.mrb[0].mxu0 %v1493
  %v1561 = vpop.f32.mrb[0].mxu0
  %v1562 = vadd.f32 0.0, %v1561
  %v1563 = vpop.f32.mrb[0].mxu0
  %v1564 = vadd.f32 0.0, %v1563
  %1565 = vdwg.mxu0
  %v1566 = vmul.f32 %v1562, %v1562
  %v1567 = vmul.f32 %v1564, %v1564
  %v1570 = vrot.slane %v1566, 7
  %v1571 = vrot.slane %v1567, 7
  %v1574 = vsub.f32 %v1562, %v1570
  %v1575 = vsub.f32 %v1564, %v1571
  %v1576 = vadd.f32 %v1574, 1e-05
  %v1577 = vadd.f32 %v1575, 1e-05
  %v1578 = vrsqrt.pop %v1576
  %v1579 = vrsqrt.pop %v1577
  %v1582 = vcombine.low %v1578, %v1579
  %v1584 = vunpack.c.l.s4 1966171168
  %v1585 = vunpack.c.0.s8 %v1584
  %v1586 = vlaneseq
  %v1587 = vshrl.u32 %v1586, 7
  %v1588 = vsub.s32 %v1585, %v1587
  %v1589 = vrot.slane %v1582, %v1588
  %v1590 = vcombine.high %v1589, %v1589
  %v1592 = vunpack.c.l.s4 1966171168
  %v1593 = vunpack.c.0.s8 %v1592
  %v1594 = vlaneseq
  %v1595 = vshrl.u32 %v1594, 7
  %v1596 = vsub.s32 %v1593, %v1595
  %v1597 = vrot.slane %v1590, %v1596
  %v1599 = vmul.f32 %v1447, %v1597
  %v1600 = vlaneseq
  %v1601 = vshrl.u32 %v1600, 7
  %v1602 = vsub.s32 0, %v1601
  %v1603 = vrot.slane %v1562, %v1602
  %v1604 = vlaneseq
  %v1605 = vshrl.u32 %v1604, 7
  %v1606 = vsub.s32 0, %v1605
  %v1607 = vrot.slane %v1564, %v1606
  %v1608 = vsub.f32 %v1439, %v1603
  %v1609 = vsub.f32 %v1440, %v1607
  %v1610 = vsub.f32 %v1441, %v1603
  %v1611 = vsub.f32 %v1442, %v1607
  %v1612 = vsub.f32 %v1443, %v1603
  %v1613 = vsub.f32 %v1444, %v1607
  %v1614 = vsub.f32 %v1445, %v1603
  %v1615 = vsub.f32 %v1446, %v1607
  %v1617 = vlaneseq
  %v1618 = vshrl.u32 %v1617, 7
  %v1619 = vsub.s32 0, %v1618
  %v1620 = vrot.slane %v1599, %v1619
  %v1621 = vlaneseq
  %v1622 = vshrl.u32 %v1621, 7
  %v1623 = vsub.s32 1, %v1622
  %v1624 = vrot.slane %v1599, %v1623
  %v1627 = vmul.f32 %v1608, %v1620
  %v1628 = vmul.f32 %v1609, %v1624
  %v1629 = vmul.f32 %v1610, %v1620
  %v1630 = vmul.f32 %v1611, %v1624
  %v1631 = vmul.f32 %v1612, %v1620
  %v1632 = vmul.f32 %v1613, %v1624
  %v1633 = vmul.f32 %v1614, %v1620
  %v1634 = vmul.f32 %v1615, %v1624
  %v1636 = vlaneseq
  %v1637 = vshrl.u32 %v1636, 7
  %v1638 = vsub.s32 0, %v1637
  %v1639 = vrot.slane %v1448, %v1638
  %v1640 = vlaneseq
  %v1641 = vshrl.u32 %v1640, 7
  %v1642 = vsub.s32 1, %v1641
  %v1643 = vrot.slane %v1448, %v1642
  %v1646 = vadd.f32 %v1627, %v1639
  %v1647 = vadd.f32 %v1628, %v1643
  %v1648 = vadd.f32 %v1629, %v1639
  %v1649 = vadd.f32 %v1630, %v1643
  %v1650 = vadd.f32 %v1631, %v1639
  %v1651 = vadd.f32 %v1632, %v1643
  %v1652 = vadd.f32 %v1633, %v1639
  %v1653 = vadd.f32 %v1634, %v1643
  %v1654 = vmax.f32 %v1646, 0.0
  %v1655 = vmax.f32 %v1647, 0.0
  %v1656 = vmax.f32 %v1648, 0.0
  %v1657 = vmax.f32 %v1649, 0.0
  %v1658 = vmax.f32 %v1650, 0.0
  %v1659 = vmax.f32 %v1651, 0.0
  %v1660 = vmax.f32 %v1652, 0.0
  %v1661 = vmax.f32 %v1653, 0.0
  %v1662 = vpack.c.bf16 %v1656, %v1654
  %v1663 = vpack.c.bf16 %v1657, %v1655
  %v1664 = vpack.c.bf16 %v1660, %v1658
  %v1665 = vpack.c.bf16 %v1661, %v1659
  %v1666 = vld [vmem:[%s5] sm:$0xff]
  %v1667 = vld [vmem:[%s5 + $0x8] sm:$0xff]
  %v1668 = vld [vmem:[%s5 + $0x10] sm:$0xff]
  %v1669 = vld [vmem:[%s5 + $0x18] sm:$0xff]
  %v1670 = vld [vmem:[%s5 + $0x20] sm:$0xff]
  %v1671 = vld [vmem:[%s5 + $0x28] sm:$0xff]
  %v1672 = vld [vmem:[%s5 + $0x30] sm:$0xff]
  %v1673 = vld [vmem:[%s5 + $0x38] sm:$0xff]
  %v1674 = vld [vmem:[%s5 + $0x40] sm:$0xff]
  %v1675 = vld [vmem:[%s5 + $0x48] sm:$0xff]
  %v1676 = vld [vmem:[%s5 + $0x50] sm:$0xff]
  %v1677 = vld [vmem:[%s5 + $0x58] sm:$0xff]
  %v1678 = vld [vmem:[%s5 + $0x60] sm:$0xff]
  %v1679 = vld [vmem:[%s5 + $0x68] sm:$0xff]
  %v1680 = vld [vmem:[%s5 + $0x70] sm:$0xff]
  %v1681 = vld [vmem:[%s5 + $0x78] sm:$0xff]
  %v1682 = vld [vmem:[%s5 + $0x80] sm:$0xff]
  %v1683 = vld [vmem:[%s5 + $0x88] sm:$0xff]
  %v1684 = vld [vmem:[%s5 + $0x90] sm:$0xff]
  %v1685 = vld [vmem:[%s5 + $0x98] sm:$0xff]
  %v1686 = vld [vmem:[%s5 + $0xa0] sm:$0xff]
  %v1687 = vld [vmem:[%s5 + $0xa8] sm:$0xff]
  %v1688 = vld [vmem:[%s5 + $0xb0] sm:$0xff]
  %v1689 = vld [vmem:[%s5 + $0xb8] sm:$0xff]
  %v1690 = vld [vmem:[%s5 + $0xc0] sm:$0xff]
  %v1691 = vld [vmem:[%s5 + $0xc8] sm:$0xff]
  %v1692 = vld [vmem:[%s5 + $0xd0] sm:$0xff]
  %v1693 = vld [vmem:[%s5 + $0xd8] sm:$0xff]
  %v1694 = vld [vmem:[%s5 + $0xe0] sm:$0xff]
  %v1695 = vld [vmem:[%s5 + $0xe8] sm:$0xff]
  %v1696 = vld [vmem:[%s5 + $0xf0] sm:$0xff]
  %v1697 = vld [vmem:[%s5 + $0xf8] sm:$0xff]
  %v1730 = vunpack.c.l.b16 %v1666
  %v1731 = vunpack.c.h.b16 %v1666
  %v1732 = vunpack.c.l.b16 %v1667
  %v1733 = vunpack.c.h.b16 %v1667
  %v1734 = vunpack.c.l.b16 %v1668
  %v1735 = vunpack.c.h.b16 %v1668
  %v1736 = vunpack.c.l.b16 %v1669
  %v1737 = vunpack.c.h.b16 %v1669
  %v1738 = vunpack.c.l.b16 %v1670
  %v1739 = vunpack.c.h.b16 %v1670
  %v1740 = vunpack.c.l.b16 %v1671
  %v1741 = vunpack.c.h.b16 %v1671
  %v1742 = vunpack.c.l.b16 %v1672
  %v1743 = vunpack.c.h.b16 %v1672
  %v1744 = vunpack.c.l.b16 %v1673
  %v1745 = vunpack.c.h.b16 %v1673
  %v1746 = vunpack.c.l.b16 %v1674
  %v1747 = vunpack.c.h.b16 %v1674
  %v1748 = vunpack.c.l.b16 %v1675
  %v1749 = vunpack.c.h.b16 %v1675
  %v1750 = vunpack.c.l.b16 %v1676
  %v1751 = vunpack.c.h.b16 %v1676
  %v1752 = vunpack.c.l.b16 %v1677
  %v1753 = vunpack.c.h.b16 %v1677
  %v1754 = vunpack.c.l.b16 %v1678
  %v1755 = vunpack.c.h.b16 %v1678
  %v1756 = vunpack.c.l.b16 %v1679
  %v1757 = vunpack.c.h.b16 %v1679
  %v1758 = vunpack.c.l.b16 %v1680
  %v1759 = vunpack.c.h.b16 %v1680
  %v1760 = vunpack.c.l.b16 %v1681
  %v1761 = vunpack.c.h.b16 %v1681
  %v1762 = vunpack.c.l.b16 %v1682
  %v1763 = vunpack.c.h.b16 %v1682
  %v1764 = vunpack.c.l.b16 %v1683
  %v1765 = vunpack.c.h.b16 %v1683
  %v1766 = vunpack.c.l.b16 %v1684
  %v1767 = vunpack.c.h.b16 %v1684
  %v1768 = vunpack.c.l.b16 %v1685
  %v1769 = vunpack.c.h.b16 %v1685
  %v1770 = vunpack.c.l.b16 %v1686
  %v1771 = vunpack.c.h.b16 %v1686
  %v1772 = vunpack.c.l.b16 %v1687
  %v1773 = vunpack.c.h.b16 %v1687
  %v1774 = vunpack.c.l.b16 %v1688
  %v1775 = vunpack.c.h.b16 %v1688
  %v1776 = vunpack.c.l.b16 %v1689
  %v1777 = vunpack.c.h.b16 %v1689
  %v1778 = vunpack.c.l.b16 %v1690
  %v1779 = vunpack.c.h.b16 %v1690
  %v1780 = vunpack.c.l.b16 %v1691
  %v1781 = vunpack.c.h.b16 %v1691
  %v1782 = vunpack.c.l.b16 %v1692
  %v1783 = vunpack.c.h.b16 %v1692
  %v1784 = vunpack.c.l.b16 %v1693
  %v1785 = vunpack.c.h.b16 %v1693
  %v1786 = vunpack.c.l.b16 %v1694
  %v1787 = vunpack.c.h.b16 %v1694
  %v1788 = vunpack.c.l.b16 %v1695
  %v1789 = vunpack.c.h.b16 %v1695
  %v1790 = vunpack.c.l.b16 %v1696
  %v1791 = vunpack.c.h.b16 %v1696
  %v1792 = vunpack.c.l.b16 %v1697
  %v1793 = vunpack.c.h.b16 %v1697
  %v1794 = vpack.c.b16 %v1732, %v1730
  %v1795 = vpack.c.b16 %v1733, %v1731
  %v1796 = vpack.c.b16 %v1736, %v1734
  %v1797 = vpack.c.b16 %v1737, %v1735
  %v1798 = vpack.c.b16 %v1740, %v1738
  %v1799 = vpack.c.b16 %v1741, %v1739
  %v1800 = vpack.c.b16 %v1744, %v1742
  %v1801 = vpack.c.b16 %v1745, %v1743
  %v1802 = vpack.c.b16 %v1748, %v1746
  %v1803 = vpack.c.b16 %v1749, %v1747
  %v1804 = vpack.c.b16 %v1752, %v1750
  %v1805 = vpack.c.b16 %v1753, %v1751
  %v1806 = vpack.c.b16 %v1756, %v1754
  %v1807 = vpack.c.b16 %v1757, %v1755
  %v1808 = vpack.c.b16 %v1760, %v1758
  %v1809 = vpack.c.b16 %v1761, %v1759
  %v1810 = vpack.c.b16 %v1764, %v1762
  %v1811 = vpack.c.b16 %v1765, %v1763
  %v1812 = vpack.c.b16 %v1768, %v1766
  %v1813 = vpack.c.b16 %v1769, %v1767
  %v1814 = vpack.c.b16 %v1772, %v1770
  %v1815 = vpack.c.b16 %v1773, %v1771
  %v1816 = vpack.c.b16 %v1776, %v1774
  %v1817 = vpack.c.b16 %v1777, %v1775
  %v1818 = vpack.c.b16 %v1780, %v1778
  %v1819 = vpack.c.b16 %v1781, %v1779
  %v1820 = vpack.c.b16 %v1784, %v1782
  %v1821 = vpack.c.b16 %v1785, %v1783
  %v1822 = vpack.c.b16 %v1788, %v1786
  %v1823 = vpack.c.b16 %v1789, %v1787
  %v1824 = vpack.c.b16 %v1792, %v1790
  %v1825 = vpack.c.b16 %v1793, %v1791
  %1858 = vmatprep.subr.bf16.mxu0 %v1795
  %1859 = vmatpush1.bf16.msra.mxu0 %v1794
  %1860 = vmatprep.subr.bf16.mxu0 %v1797
  %1861 = vmatpush1.bf16.msra.mxu0 %v1796
  %1862 = vmatprep.subr.bf16.mxu0 %v1799
  %1863 = vmatpush1.bf16.msra.mxu0 %v1798
  %1864 = vmatprep.subr.bf16.mxu0 %v1801
  %1865 = vmatpush1.bf16.msra.mxu0 %v1800
  %1866 = vmatprep.subr.bf16.mxu0 %v1803
  %1867 = vmatpush1.bf16.msra.mxu0 %v1802
  %1868 = vmatprep.subr.bf16.mxu0 %v1805
  %1869 = vmatpush1.bf16.msra.mxu0 %v1804
  %1870 = vmatprep.subr.bf16.mxu0 %v1807
  %1871 = vmatpush1.bf16.msra.mxu0 %v1806
  %1872 = vmatprep.subr.bf16.mxu0 %v1809
  %1873 = vmatpush1.bf16.msra.mxu0 %v1808
  %1874 = vmatprep.subr.bf16.mxu0 %v1811
  %1875 = vmatpush1.bf16.msra.mxu0 %v1810
  %1876 = vmatprep.subr.bf16.mxu0 %v1813
  %1877 = vmatpush1.bf16.msra.mxu0 %v1812
  %1878 = vmatprep.subr.bf16.mxu0 %v1815
  %1879 = vmatpush1.bf16.msra.mxu0 %v1814
  %1880 = vmatprep.subr.bf16.mxu0 %v1817
  %1881 = vmatpush1.bf16.msra.mxu0 %v1816
  %1882 = vmatprep.subr.bf16.mxu0 %v1819
  %1883 = vmatpush1.bf16.msra.mxu0 %v1818
  %1884 = vmatprep.subr.bf16.mxu0 %v1821
  %1885 = vmatpush1.bf16.msra.mxu0 %v1820
  %1886 = vmatprep.subr.bf16.mxu0 %v1823
  %1887 = vmatpush1.bf16.msra.mxu0 %v1822
  %1888 = vmatprep.subr.bf16.mxu0 %v1825
  %1889 = vmatpush1.bf16.msra.mxu0 %v1824
  %1890 = vmatprep.mubr.bf16.mxu0 %v1663
  %1891 = vmatmul.mubr.bf16.gmra.mrb[0].mxu0 %v1662
  %v1892 = vpop.f32.mrb[0].mxu0
  %v1893 = vadd.f32 0.0, %v1892
  %v1894 = vpop.f32.mrb[0].mxu0
  %v1895 = vadd.f32 0.0, %v1894
  %v1896 = vpop.f32.mrb[0].mxu0
  %v1897 = vadd.f32 0.0, %v1896
  %v1898 = vpop.f32.mrb[0].mxu0
  %v1899 = vadd.f32 0.0, %v1898
  %1900 = vmatprep.mubr.bf16.mxu0 %v1665
  %1901 = vmatmul.mubr.bf16.gmra.mrb[0].mxu0 %v1664
  %v1902 = vpop.f32.mrb[0].mxu0
  %v1903 = vadd.f32 0.0, %v1902
  %v1904 = vpop.f32.mrb[0].mxu0
  %v1905 = vadd.f32 0.0, %v1904
  %v1906 = vpop.f32.mrb[0].mxu0
  %v1907 = vadd.f32 0.0, %v1906
  %v1908 = vpop.f32.mrb[0].mxu0
  %v1909 = vadd.f32 0.0, %v1908
  %1910 = vdwg.mxu0
  %v1911 = vld [vmem:[%s11] sm:$0x3]
  %v1912 = vld [vmem:[%s12] sm:$0x3]
  %v1913 = vadd.f32 %v1893, %v1897
  %v1914 = vadd.f32 %v1913, %v1903
  %v1915 = vadd.f32 %v1914, %v1907
  %v1916 = vrot.slane %v1915, 4
  %v1917 = vadd.f32 %v1915, %v1916
  %v1918 = vrot.slane %v1917, 2
  %v1919 = vadd.f32 %v1917, %v1918
  %v1920 = vrot.slane %v1919, 1
  %v1921 = vadd.f32 %v1919, %v1920
  %v1922 = vadd.f32 %v1895, %v1899
  %v1923 = vadd.f32 %v1922, %v1905
  %v1924 = vadd.f32 %v1923, %v1909
  %v1925 = vrot.slane %v1924, 4
  %v1926 = vadd.f32 %v1924, %v1925
  %v1927 = vrot.slane %v1926, 2
  %v1928 = vadd.f32 %v1926, %v1927
  %v1929 = vrot.slane %v1928, 1
  %v1930 = vadd.f32 %v1928, %v1929
  %v1931 = vmul.f32 %v1893, %v1893
  %v1932 = vmul.f32 %v1895, %v1895
  %v1933 = vmul.f32 %v1897, %v1897
  %v1934 = vmul.f32 %v1899, %v1899
  %v1935 = vmul.f32 %v1903, %v1903
  %v1936 = vmul.f32 %v1905, %v1905
  %v1937 = vmul.f32 %v1907, %v1907
  %v1938 = vmul.f32 %v1909, %v1909
  %v1939 = vadd.f32 %v1931, %v1933
  %v1940 = vadd.f32 %v1939, %v1935
  %v1941 = vadd.f32 %v1940, %v1937
  %v1942 = vrot.slane %v1941, 4
  %v1943 = vadd.f32 %v1941, %v1942
  %v1944 = vrot.slane %v1943, 2
  %v1945 = vadd.f32 %v1943, %v1944
  %v1946 = vrot.slane %v1945, 1
  %v1947 = vadd.f32 %v1945, %v1946
  %v1948 = vadd.f32 %v1932, %v1934
  %v1949 = vadd.f32 %v1948, %v1936
  %v1950 = vadd.f32 %v1949, %v1938
  %v1951 = vrot.slane %v1950, 4
  %v1952 = vadd.f32 %v1950, %v1951
  %v1953 = vrot.slane %v1952, 2
  %v1954 = vadd.f32 %v1952, %v1953
  %v1955 = vrot.slane %v1954, 1
  %v1956 = vadd.f32 %v1954, %v1955
  %v1957 = vsel %vm464, %v1921, %v1947
  %v1958 = vsel %vm464, %v1930, %v1956
  %1959 = vmatprep.subr.mxu0 %v45
  %1960 = vmatpush1.msra.mxu0 %v44
  %1961 = vmatprep.subr.mxu0 %v47
  %1962 = vmatpush1.msra.mxu0 %v46
  %1963 = vmatprep.subr.mxu0 %v49
  %1964 = vmatpush1.msra.mxu0 %v48
  %1965 = vmatprep.subr.mxu0 %v51
  %1966 = vmatpush1.msra.mxu0 %v50
  %1967 = vmatprep.subr.mxu0 %v53
  %1968 = vmatpush1.msra.mxu0 %v52
  %1969 = vmatprep.subr.mxu0 %v55
  %1970 = vmatpush1.msra.mxu0 %v54
  %1971 = vmatprep.subr.mxu0 %v57
  %1972 = vmatpush1.msra.mxu0 %v56
  %1973 = vmatprep.subr.mxu0 %v59
  %1974 = vmatpush1.msra.mxu0 %v58
  %1975 = vmatprep.subr.mxu0 %v61
  %1976 = vmatpush1.msra.mxu0 %v60
  %1977 = vmatprep.subr.mxu0 %v63
  %1978 = vmatpush1.msra.mxu0 %v62
  %1979 = vmatprep.subr.mxu0 %v65
  %1980 = vmatpush1.msra.mxu0 %v64
  %1981 = vmatprep.subr.mxu0 %v67
  %1982 = vmatpush1.msra.mxu0 %v66
  %1983 = vmatprep.subr.mxu0 %v69
  %1984 = vmatpush1.msra.mxu0 %v68
  %1985 = vmatprep.subr.mxu0 %v71
  %1986 = vmatpush1.msra.mxu0 %v70
  %1987 = vmatprep.subr.mxu0 %v73
  %1988 = vmatpush1.msra.mxu0 %v72
  %1989 = vmatprep.subr.mxu0 %v75
  %1990 = vmatpush1.msra.mxu0 %v74
  %1991 = vmatprep.subr.mxu0 %v77
  %1992 = vmatpush1.msra.mxu0 %v76
  %1993 = vmatprep.subr.mxu0 %v79
  %1994 = vmatpush1.msra.mxu0 %v78
  %1995 = vmatprep.subr.mxu0 %v81
  %1996 = vmatpush1.msra.mxu0 %v80
  %1997 = vmatprep.subr.mxu0 %v83
  %1998 = vmatpush1.msra.mxu0 %v82
  %1999 = vmatprep.subr.mxu0 %v85
  %2000 = vmatpush1.msra.mxu0 %v84
  %2001 = vmatprep.subr.mxu0 %v87
  %2002 = vmatpush1.msra.mxu0 %v86
  %2003 = vmatprep.subr.mxu0 %v89
  %2004 = vmatpush1.msra.mxu0 %v88
  %2005 = vmatprep.subr.mxu0 %v91
  %2006 = vmatpush1.msra.mxu0 %v90
  %2007 = vmatprep.subr.mxu0 %v93
  %2008 = vmatpush1.msra.mxu0 %v92
  %2009 = vmatprep.subr.mxu0 %v95
  %2010 = vmatpush1.msra.mxu0 %v94
  %2011 = vmatprep.subr.mxu0 %v97
  %2012 = vmatpush1.msra.mxu0 %v96
  %2013 = vmatprep.subr.mxu0 %v99
  %2014 = vmatpush1.msra.mxu0 %v98
  %2015 = vmatprep.subr.mxu0 %v101
  %2016 = vmatpush1.msra.mxu0 %v100
  %2017 = vmatprep.subr.mxu0 %v103
  %2018 = vmatpush1.msra.mxu0 %v102
  %2019 = vmatprep.subr.mxu0 %v105
  %2020 = vmatpush1.msra.mxu0 %v104
  %2021 = vmatprep.subr.mxu0 %v107
  %2022 = vmatpush1.msra.mxu0 %v106
  %2023 = vmatprep.mubr.f32.mxu0 %v1958
  %2024 = vmatmul.mubr.f32.gmra.mrb[0].mxu0 %v1957
  %v2025 = vpop.f32.mrb[0].mxu0
  %v2026 = vadd.f32 0.0, %v2025
  %v2027 = vpop.f32.mrb[0].mxu0
  %v2028 = vadd.f32 0.0, %v2027
  %2029 = vdwg.mxu0
  %v2030 = vmul.f32 %v2026, %v2026
  %v2031 = vmul.f32 %v2028, %v2028
  %v2034 = vrot.slane %v2030, 7
  %v2035 = vrot.slane %v2031, 7
  %v2038 = vsub.f32 %v2026, %v2034
  %v2039 = vsub.f32 %v2028, %v2035
  %v2040 = vadd.f32 %v2038, 1e-05
  %v2041 = vadd.f32 %v2039, 1e-05
  %v2042 = vrsqrt.pop %v2040
  %v2043 = vrsqrt.pop %v2041
  %v2046 = vcombine.low %v2042, %v2043
  %v2048 = vunpack.c.l.s4 1966171168
  %v2049 = vunpack.c.0.s8 %v2048
  %v2050 = vlaneseq
  %v2051 = vshrl.u32 %v2050, 7
  %v2052 = vsub.s32 %v2049, %v2051
  %v2053 = vrot.slane %v2046, %v2052
  %v2054 = vcombine.high %v2053, %v2053
  %v2056 = vunpack.c.l.s4 1966171168
  %v2057 = vunpack.c.0.s8 %v2056
  %v2058 = vlaneseq
  %v2059 = vshrl.u32 %v2058, 7
  %v2060 = vsub.s32 %v2057, %v2059
  %v2061 = vrot.slane %v2054, %v2060
  %v2063 = vmul.f32 %v1911, %v2061
  %v2064 = vlaneseq
  %v2065 = vshrl.u32 %v2064, 7
  %v2066 = vsub.s32 0, %v2065
  %v2067 = vrot.slane %v2026, %v2066
  %v2068 = vlaneseq
  %v2069 = vshrl.u32 %v2068, 7
  %v2070 = vsub.s32 0, %v2069
  %v2071 = vrot.slane %v2028, %v2070
  %v2072 = vsub.f32 %v1893, %v2067
  %v2073 = vsub.f32 %v1895, %v2071
  %v2074 = vsub.f32 %v1897, %v2067
  %v2075 = vsub.f32 %v1899, %v2071
  %v2076 = vsub.f32 %v1903, %v2067
  %v2077 = vsub.f32 %v1905, %v2071
  %v2078 = vsub.f32 %v1907, %v2067
  %v2079 = vsub.f32 %v1909, %v2071
  %v2081 = vlaneseq
  %v2082 = vshrl.u32 %v2081, 7
  %v2083 = vsub.s32 0, %v2082
  %v2084 = vrot.slane %v2063, %v2083
  %v2085 = vlaneseq
  %v2086 = vshrl.u32 %v2085, 7
  %v2087 = vsub.s32 1, %v2086
  %v2088 = vrot.slane %v2063, %v2087
  %v2091 = vmul.f32 %v2072, %v2084
  %v2092 = vmul.f32 %v2073, %v2088
  %v2093 = vmul.f32 %v2074, %v2084
  %v2094 = vmul.f32 %v2075, %v2088
  %v2095 = vmul.f32 %v2076, %v2084
  %v2096 = vmul.f32 %v2077, %v2088
  %v2097 = vmul.f32 %v2078, %v2084
  %v2098 = vmul.f32 %v2079, %v2088
  %v2100 = vlaneseq
  %v2101 = vshrl.u32 %v2100, 7
  %v2102 = vsub.s32 0, %v2101
  %v2103 = vrot.slane %v1912, %v2102
  %v2104 = vlaneseq
  %v2105 = vshrl.u32 %v2104, 7
  %v2106 = vsub.s32 1, %v2105
  %v2107 = vrot.slane %v1912, %v2106
  %v2110 = vadd.f32 %v2091, %v2103
  %v2111 = vadd.f32 %v2092, %v2107
  %v2112 = vadd.f32 %v2093, %v2103
  %v2113 = vadd.f32 %v2094, %v2107
  %v2114 = vadd.f32 %v2095, %v2103
  %v2115 = vadd.f32 %v2096, %v2107
  %v2116 = vadd.f32 %v2097, %v2103
  %v2117 = vadd.f32 %v2098, %v2107
  %v2118 = vadd.f32 %v2110, %v161
  %v2119 = vadd.f32 %v2111, %v162
  %v2120 = vadd.f32 %v2112, %v163
  %v2121 = vadd.f32 %v2113, %v164
  %v2122 = vadd.f32 %v2114, %v165
  %v2123 = vadd.f32 %v2115, %v166
  %v2124 = vadd.f32 %v2116, %v167
  %v2125 = vadd.f32 %v2117, %v168
  %v2126 = vmax.f32 %v2118, 0.0
  %v2127 = vmax.f32 %v2119, 0.0
  %v2128 = vmax.f32 %v2120, 0.0
  %v2129 = vmax.f32 %v2121, 0.0
  %v2130 = vmax.f32 %v2122, 0.0
  %v2131 = vmax.f32 %v2123, 0.0
  %v2132 = vmax.f32 %v2124, 0.0
  %v2133 = vmax.f32 %v2125, 0.0
  %2134 = vst [vmem:[%s13] sm:$0xff] %v2126
  %2135 = vst [vmem:[%s13 + $0x8] sm:$0xff] %v2127
  %2136 = vst [vmem:[%s13 + $0x10] sm:$0xff] %v2128
  %2137 = vst [vmem:[%s13 + $0x18] sm:$0xff] %v2129
  %2138 = vst [vmem:[%s13 + $0x20] sm:$0xff] %v2130
  %2139 = vst [vmem:[%s13 + $0x28] sm:$0xff] %v2131
  %2140 = vst [vmem:[%s13 + $0x30] sm:$0xff] %v2132
  %2141 = vst [vmem:[%s13 + $0x38] sm:$0xff] %v2133
  // Predicated region
  $region54: #{fwd.1} parent=0 // pred_check
    _
  $region55: #{fwd.1} parent=0 // pred_check_branch
    %2143 = sbr.rel (0) target = $region57
  $region56: #{fwd.1} parent=0 // pred_region
    _
  $region57: #{fwd.1} parent=0 // pred_fallthru
    _
  // Predicated region
  $region58: #{fwd.1} parent=0 // pred_check
    _
  $region59: #{fwd.1} parent=0 // pred_check_branch
    %2145 = sbr.rel (0) target = $region61
  $region60: #{fwd.1} parent=0 // pred_region
    _
  $region61: #{fwd.1} parent=0 // pred_fallthru
    _

</llo_original>
